<compile_context>
chip_gen: v6e
topology: v6e:2x2x1
jax: 0.10.0
libtpu: 0.0.40
codegen_flags: <defaults>
</compile_context>

<pallas_src>
import jax
import jax.numpy as jnp
from jax.experimental import pallas as pl
from jax.experimental.pallas import tpu as pltpu

N_NODES = 10
F_IN = 1
F_HID = 8
FC1_OUT = 16
FC2_OUT = 3
OUT_PAD = 128          # lane-dense output width (sliced to FC2_OUT outside)


# ----------------------------------------------------------------------------
# Fused kernel: conv1 -> relu -> conv2 -> relu -> flatten -> fc1 -> relu -> fc2
# for one batch tile.
#   a: (TB, N, N) normalized adjacency (bf16), x: (TB, N, 1) node feats (bf16)
#   out: (TB, OUT_PAD) f32, logits in the first FC2_OUT lanes
# ----------------------------------------------------------------------------
def gcn_fused_kernel(a_ref, x_ref, w1_ref, b1_ref, w2s_ref, b2t_ref,
                     wf1_ref, bf1_ref, wf2_ref, bf2_ref, o_ref):
    # Hoisted loads (weights are tiny; inputs upcast bf16 -> f32 once).
    a = a_ref[...].astype(jnp.float32)      # (TB, N, N)
    x = x_ref[...].astype(jnp.float32)      # (TB, N, 1)
    w1 = w1_ref[...]                        # (1, 8)
    b1 = b1_ref[...]                        # (1, 8)
    w2s = w2s_ref[...]                      # (N, 8, 80)  block-rows of kron(I, W2)
    b2t = b2t_ref[...]                      # (1, 80)     tile(b2, N)
    wf1 = wf1_ref[...]                      # (80, 16)
    bf1 = bf1_ref[...]                      # (1, 16)
    wf2 = wf2_ref[...]                      # (16, 128)   zero-padded fc2 weight
    bf2 = bf2_ref[...]                      # (1, 128)    zero-padded fc2 bias

    # ---- conv1:  relu(A_hat @ X @ W1 + b1),  F_IN == 1 -----------------
    # A_hat @ X unrolled over the 10 source nodes: pure VPU broadcast-FMAs,
    # no per-graph MXU matmuls, batch stays on sublanes.
    ax = a[:, :, 0:1] * x[:, 0:1, :]
    for j in range(1, N_NODES):
        ax = ax + a[:, :, j:j + 1] * x[:, j:j + 1, :]        # (TB, N, 1)
    h1 = jnp.maximum(ax * w1 + b1, 0.0)                      # (TB, N, 8)

    # ---- conv2 propagation:  A_hat @ H1 (same unrolled VPU form) -------
    g1 = a[:, :, 0:1] * h1[:, 0:1, :]
    for j in range(1, N_NODES):
        g1 = g1 + a[:, :, j:j + 1] * h1[:, j:j + 1, :]       # (TB, N, 8)

    # ---- conv2 feature transform fused with the node-major flatten ------
    # flat[:, 8n:8n+8] = g1[:, n, :] @ W2  via the n-th block-row of
    # kron(I_10, W2); partial products reduced with a log-depth tree.
    parts = [jnp.dot(g1[:, n, :], w2s[n], preferred_element_type=jnp.float32)
             for n in range(N_NODES)]                        # each (TB, 80)
    while len(parts) > 1:
        nxt = [parts[i] + parts[i + 1] for i in range(0, len(parts) - 1, 2)]
        if len(parts) % 2:
            nxt.append(parts[-1])
        parts = nxt
    h2 = jnp.maximum(parts[0] + b2t, 0.0)                    # (TB, 80) == view(-1, 80)

    # ---- MLP head: two plain 2-D MXU matmuls ----------------------------
    h3 = jnp.maximum(
        jnp.dot(h2, wf1, preferred_element_type=jnp.float32) + bf1, 0.0)  # (TB, 16)
    # fc2 padded to 128 output lanes -> single lane-dense HBM store.
    o_ref[...] = jnp.dot(h3, wf2, preferred_element_type=jnp.float32) + bf2


def _pick_batch_tile(B):
    """Largest multiple-of-8 divisor of B that is <= 256 (cap keeps the padded
    working set well inside v7x's 64 MiB VMEM and gives grid >= 2 for large
    batches); tiny / ragged batches fall back to one full-batch grid step."""
    if B < 8 or B % 8 != 0:
        return B
    tb = min(B, 256)
    while B % tb != 0:
        tb -= 8
    return tb


def gcn_forward(a_hat, x, params, *, batch_tile=None):
    """a_hat: (B, N, N) normalized adjacency, x: (B, N, 1) node features."""
    B = a_hat.shape[0]
    w1, b1, w2, b2, wf1, bf1, wf2, bf2 = params

    # conv2 weight as block-rows of kron(I_N, W2):
    #   w2s[n, f, 8*m + g] = [n == m] * w2[f, g]
    eye = jnp.eye(N_NODES, dtype=jnp.float32)
    w2s = jnp.einsum('nm,fg->nfmg', eye, w2).reshape(
        N_NODES, F_HID, N_NODES * F_HID)
    b2t = jnp.tile(b2.reshape(1, F_HID), (1, N_NODES))               # (1, 80)

    # fc2 weight / bias zero-padded to a lane-dense 128-wide output block.
    wf2p = jnp.zeros((FC1_OUT, OUT_PAD), jnp.float32).at[:, :FC2_OUT].set(wf2)
    bf2p = jnp.zeros((1, OUT_PAD), jnp.float32).at[:, :FC2_OUT].set(bf2)

    # bf16 inputs halve HBM traffic of the dominant operand (a_hat);
    # all in-kernel math / accumulation stays f32.
    a_bf = a_hat.astype(jnp.bfloat16)
    x_bf = x.astype(jnp.bfloat16)

    TB = _pick_batch_tile(B) if batch_tile is None else batch_tile
    assert B % TB == 0, "batch must be divisible by the batch tile"
    assert TB % 8 == 0 or TB == B, "batch tile must be a multiple of 8 (or == B)"
    grid = (B // TB,)

    def wspec(shape):
        # full-array weight block, same block every grid step
        return pl.BlockSpec(shape, lambda i, s=shape: (0,) * len(s))

    out = pl.pallas_call(
        gcn_fused_kernel,
        out_shape=jax.ShapeDtypeStruct((B, OUT_PAD), jnp.float32),
        grid=grid,
        in_specs=[
            pl.BlockSpec((TB, N_NODES, N_NODES), lambda i: (i, 0, 0)),   # a_hat
            pl.BlockSpec((TB, N_NODES, F_IN), lambda i: (i, 0, 0)),      # x
            wspec((F_IN, F_HID)),                                        # w1
            wspec((1, F_HID)),                                           # b1
            wspec((N_NODES, F_HID, N_NODES * F_HID)),                    # w2s
            wspec((1, N_NODES * F_HID)),                                 # b2t
            wspec((N_NODES * F_HID, FC1_OUT)),                           # wf1
            wspec((1, FC1_OUT)),                                         # bf1
            wspec((FC1_OUT, OUT_PAD)),                                   # wf2 (padded)
            wspec((1, OUT_PAD)),                                         # bf2 (padded)
        ],
        out_specs=pl.BlockSpec((TB, OUT_PAD), lambda i: (i, 0)),
        compiler_params=pltpu.CompilerParams(
            dimension_semantics=("parallel",),
            vmem_limit_bytes=48 * 1024 * 1024),
    )(a_bf, x_bf, w1, b1, w2s, b2t, wf1, bf1, wf2p, bf2p)

    return out[:, :FC2_OUT]


# ----------------------------------------------------------------------------
# Glue: build the GCN-normalized dense adjacency  D^-1/2 (A + I) D^-1/2
# from edge_index / edge_attr (PyG GCNConv semantics, self-loop weight 1).
# Irregular scatter -> dense matrix stays in plain JAX (no Pallas equivalent).
# ----------------------------------------------------------------------------
def build_norm_adj(edge_index, edge_attr, num_nodes):
    src, dst = edge_index[0], edge_index[1]            # messages flow src -> dst
    adj = jnp.zeros((num_nodes, num_nodes), jnp.float32)
    adj = adj.at[dst, src].add(edge_attr)              # A[i, j] = w(j -> i)
    adj = adj + jnp.eye(num_nodes, dtype=jnp.float32)  # self loops, weight 1
    deg = adj.sum(axis=1)                               # in-degree incl. self
    dinv = jnp.where(deg > 0, 1.0 / jnp.sqrt(deg), 0.0)
    return dinv[:, None] * adj * dinv[None, :]


def init_params(key):
    ks = jax.random.split(key, 8)
    s = 0.1
    w1 = jax.random.normal(ks[0], (F_IN, F_HID), jnp.float32) * s
    b1 = jax.random.normal(ks[1], (1, F_HID), jnp.float32) * s
    w2 = jax.random.normal(ks[2], (F_HID, F_HID), jnp.float32) * s
    b2 = jax.random.normal(ks[3], (1, F_HID), jnp.float32) * s
    wf1 = jax.random.normal(ks[4], (N_NODES * F_HID, FC1_OUT), jnp.float32) * s
    bf1 = jax.random.normal(ks[5], (1, FC1_OUT), jnp.float32) * s
    wf2 = jax.random.normal(ks[6], (FC1_OUT, FC2_OUT), jnp.float32) * s
    bf2 = jax.random.normal(ks[7], (1, FC2_OUT), jnp.float32) * s
    return (w1, b1, w2, b2, wf1, bf1, wf2, bf2)


if __name__ == "__main__":
    key = jax.random.PRNGKey(0)
    kp, kx, kw = jax.random.split(key, 3)

    B = 2  # batch of graphs, each with N_NODES nodes

    params = init_params(kp)

    # Node features: (B, N, 1) float32
    x = jax.random.normal(kx, (B, N_NODES, F_IN), jnp.float32)

    # Deterministic bidirectional ring graph, random edge weights per graph.
    idx = jnp.arange(N_NODES, dtype=jnp.int32)
    src = jnp.concatenate([idx, (idx + 1) % N_NODES])
    dst = jnp.concatenate([(idx + 1) % N_NODES, idx])
    edge_index = jnp.stack([src, dst])                        # (2, 2*N)
    edge_attrs = jax.random.uniform(kw, (B, edge_index.shape[1]),
                                    jnp.float32, 0.5, 1.5)
    # vmapped adjacency construction (one batched scatter, not B programs)
    a_hat = jax.vmap(lambda ea: build_norm_adj(edge_index, ea, N_NODES))(
        edge_attrs)                                           # (B, N, N)

    out = jax.jit(gcn_forward)(a_hat, x, params)
    jax.block_until_ready(out)
    assert out.shape == (B, FC2_OUT) and out.dtype == jnp.float32
    print("KERNEL_OK")
</pallas_src>

<mosaic_0001>
module attributes {stable_mosaic.version = 11 : i64} {
  func.func @gcn_fused_kernel(%arg0: i32, %arg1: memref<2x10x10xbf16, #tpu.memory_space<vmem>>, %arg2: memref<2x10x1xbf16, #tpu.memory_space<vmem>>, %arg3: memref<1x8xf32, #tpu.memory_space<vmem>>, %arg4: memref<1x8xf32, #tpu.memory_space<vmem>>, %arg5: memref<10x8x80xf32, #tpu.memory_space<vmem>>, %arg6: memref<1x80xf32, #tpu.memory_space<vmem>>, %arg7: memref<80x16xf32, #tpu.memory_space<vmem>>, %arg8: memref<1x16xf32, #tpu.memory_space<vmem>>, %arg9: memref<16x128xf32, #tpu.memory_space<vmem>>, %arg10: memref<1x128xf32, #tpu.memory_space<vmem>>, %arg11: memref<2x128xf32, #tpu.memory_space<vmem>>) attributes {dimension_semantics = [#tpu.dimension_semantics<parallel>], iteration_bounds = array<i64: 1>, scalar_prefetch = 0 : i64, scratch_operands = 0 : i64, tpu.core_type = #tpu.core_type<tc>, window_params = [{transform_indices = @transform_0, window_bounds = array<i64: 2, 10, 10>}, {transform_indices = @transform_1, window_bounds = array<i64: 2, 10, 1>}, {pipeline_mode = #tpu.pipeline_mode<synchronous>, transform_indices = @transform_2, window_bounds = array<i64: 1, 8>}, {pipeline_mode = #tpu.pipeline_mode<synchronous>, transform_indices = @transform_3, window_bounds = array<i64: 1, 8>}, {pipeline_mode = #tpu.pipeline_mode<synchronous>, transform_indices = @transform_4, window_bounds = array<i64: 10, 8, 80>}, {pipeline_mode = #tpu.pipeline_mode<synchronous>, transform_indices = @transform_5, window_bounds = array<i64: 1, 80>}, {pipeline_mode = #tpu.pipeline_mode<synchronous>, transform_indices = @transform_6, window_bounds = array<i64: 80, 16>}, {pipeline_mode = #tpu.pipeline_mode<synchronous>, transform_indices = @transform_7, window_bounds = array<i64: 1, 16>}, {pipeline_mode = #tpu.pipeline_mode<synchronous>, transform_indices = @transform_8, window_bounds = array<i64: 16, 128>}, {pipeline_mode = #tpu.pipeline_mode<synchronous>, transform_indices = @transform_9, window_bounds = array<i64: 1, 128>}, {transform_indices = @transform_10, window_bounds = array<i64: 2, 128>}]} {
    %c0 = arith.constant 0 : index
    %c0_0 = arith.constant 0 : index
    %c0_1 = arith.constant 0 : index
    %0 = vector.load %arg1[%c0, %c0_0, %c0_1] : memref<2x10x10xbf16, #tpu.memory_space<vmem>>, vector<2x10x10xbf16>
    %1 = arith.extf %0 : vector<2x10x10xbf16> to vector<2x10x10xf32>
    %c0_2 = arith.constant 0 : index
    %c0_3 = arith.constant 0 : index
    %c0_4 = arith.constant 0 : index
    %2 = vector.load %arg2[%c0_2, %c0_3, %c0_4] : memref<2x10x1xbf16, #tpu.memory_space<vmem>>, vector<2x10x1xbf16>
    %3 = arith.extf %2 : vector<2x10x1xbf16> to vector<2x10x1xf32>
    %c0_5 = arith.constant 0 : index
    %c0_6 = arith.constant 0 : index
    %4 = vector.load %arg3[%c0_5, %c0_6] : memref<1x8xf32, #tpu.memory_space<vmem>>, vector<1x8xf32>
    %c0_7 = arith.constant 0 : index
    %c0_8 = arith.constant 0 : index
    %5 = vector.load %arg4[%c0_7, %c0_8] : memref<1x8xf32, #tpu.memory_space<vmem>>, vector<1x8xf32>
    %c0_9 = arith.constant 0 : index
    %c0_10 = arith.constant 0 : index
    %c0_11 = arith.constant 0 : index
    %6 = vector.load %arg5[%c0_9, %c0_10, %c0_11] : memref<10x8x80xf32, #tpu.memory_space<vmem>>, vector<10x8x80xf32>
    %c0_12 = arith.constant 0 : index
    %c0_13 = arith.constant 0 : index
    %7 = vector.load %arg6[%c0_12, %c0_13] : memref<1x80xf32, #tpu.memory_space<vmem>>, vector<1x80xf32>
    %c0_14 = arith.constant 0 : index
    %c0_15 = arith.constant 0 : index
    %8 = vector.load %arg7[%c0_14, %c0_15] : memref<80x16xf32, #tpu.memory_space<vmem>>, vector<80x16xf32>
    %c0_16 = arith.constant 0 : index
    %c0_17 = arith.constant 0 : index
    %9 = vector.load %arg8[%c0_16, %c0_17] : memref<1x16xf32, #tpu.memory_space<vmem>>, vector<1x16xf32>
    %c0_18 = arith.constant 0 : index
    %c0_19 = arith.constant 0 : index
    %10 = vector.load %arg9[%c0_18, %c0_19] : memref<16x128xf32, #tpu.memory_space<vmem>>, vector<16x128xf32>
    %c0_20 = arith.constant 0 : index
    %c0_21 = arith.constant 0 : index
    %11 = vector.load %arg10[%c0_20, %c0_21] : memref<1x128xf32, #tpu.memory_space<vmem>>, vector<1x128xf32>
    %12 = vector.extract_strided_slice %1 {offsets = [0, 0, 0], sizes = [2, 10, 1], strides = [1, 1, 1]} : vector<2x10x10xf32> to vector<2x10x1xf32>
    %13 = vector.extract_strided_slice %3 {offsets = [0, 0, 0], sizes = [2, 1, 1], strides = [1, 1, 1]} : vector<2x10x1xf32> to vector<2x1x1xf32>
    %14 = vector.broadcast %13 : vector<2x1x1xf32> to vector<2x10x1xf32>
    %15 = arith.mulf %12, %14 : vector<2x10x1xf32>
    %16 = vector.extract_strided_slice %1 {offsets = [0, 0, 1], sizes = [2, 10, 1], strides = [1, 1, 1]} : vector<2x10x10xf32> to vector<2x10x1xf32>
    %17 = vector.extract_strided_slice %3 {offsets = [0, 1, 0], sizes = [2, 1, 1], strides = [1, 1, 1]} : vector<2x10x1xf32> to vector<2x1x1xf32>
    %18 = vector.broadcast %17 : vector<2x1x1xf32> to vector<2x10x1xf32>
    %19 = arith.mulf %16, %18 : vector<2x10x1xf32>
    %20 = arith.addf %15, %19 : vector<2x10x1xf32>
    %21 = vector.extract_strided_slice %1 {offsets = [0, 0, 2], sizes = [2, 10, 1], strides = [1, 1, 1]} : vector<2x10x10xf32> to vector<2x10x1xf32>
    %22 = vector.extract_strided_slice %3 {offsets = [0, 2, 0], sizes = [2, 1, 1], strides = [1, 1, 1]} : vector<2x10x1xf32> to vector<2x1x1xf32>
    %23 = vector.broadcast %22 : vector<2x1x1xf32> to vector<2x10x1xf32>
    %24 = arith.mulf %21, %23 : vector<2x10x1xf32>
    %25 = arith.addf %20, %24 : vector<2x10x1xf32>
    %26 = vector.extract_strided_slice %1 {offsets = [0, 0, 3], sizes = [2, 10, 1], strides = [1, 1, 1]} : vector<2x10x10xf32> to vector<2x10x1xf32>
    %27 = vector.extract_strided_slice %3 {offsets = [0, 3, 0], sizes = [2, 1, 1], strides = [1, 1, 1]} : vector<2x10x1xf32> to vector<2x1x1xf32>
    %28 = vector.broadcast %27 : vector<2x1x1xf32> to vector<2x10x1xf32>
    %29 = arith.mulf %26, %28 : vector<2x10x1xf32>
    %30 = arith.addf %25, %29 : vector<2x10x1xf32>
    %31 = vector.extract_strided_slice %1 {offsets = [0, 0, 4], sizes = [2, 10, 1], strides = [1, 1, 1]} : vector<2x10x10xf32> to vector<2x10x1xf32>
    %32 = vector.extract_strided_slice %3 {offsets = [0, 4, 0], sizes = [2, 1, 1], strides = [1, 1, 1]} : vector<2x10x1xf32> to vector<2x1x1xf32>
    %33 = vector.broadcast %32 : vector<2x1x1xf32> to vector<2x10x1xf32>
    %34 = arith.mulf %31, %33 : vector<2x10x1xf32>
    %35 = arith.addf %30, %34 : vector<2x10x1xf32>
    %36 = vector.extract_strided_slice %1 {offsets = [0, 0, 5], sizes = [2, 10, 1], strides = [1, 1, 1]} : vector<2x10x10xf32> to vector<2x10x1xf32>
    %37 = vector.extract_strided_slice %3 {offsets = [0, 5, 0], sizes = [2, 1, 1], strides = [1, 1, 1]} : vector<2x10x1xf32> to vector<2x1x1xf32>
    %38 = vector.broadcast %37 : vector<2x1x1xf32> to vector<2x10x1xf32>
    %39 = arith.mulf %36, %38 : vector<2x10x1xf32>
    %40 = arith.addf %35, %39 : vector<2x10x1xf32>
    %41 = vector.extract_strided_slice %1 {offsets = [0, 0, 6], sizes = [2, 10, 1], strides = [1, 1, 1]} : vector<2x10x10xf32> to vector<2x10x1xf32>
    %42 = vector.extract_strided_slice %3 {offsets = [0, 6, 0], sizes = [2, 1, 1], strides = [1, 1, 1]} : vector<2x10x1xf32> to vector<2x1x1xf32>
    %43 = vector.broadcast %42 : vector<2x1x1xf32> to vector<2x10x1xf32>
    %44 = arith.mulf %41, %43 : vector<2x10x1xf32>
    %45 = arith.addf %40, %44 : vector<2x10x1xf32>
    %46 = vector.extract_strided_slice %1 {offsets = [0, 0, 7], sizes = [2, 10, 1], strides = [1, 1, 1]} : vector<2x10x10xf32> to vector<2x10x1xf32>
    %47 = vector.extract_strided_slice %3 {offsets = [0, 7, 0], sizes = [2, 1, 1], strides = [1, 1, 1]} : vector<2x10x1xf32> to vector<2x1x1xf32>
    %48 = vector.broadcast %47 : vector<2x1x1xf32> to vector<2x10x1xf32>
    %49 = arith.mulf %46, %48 : vector<2x10x1xf32>
    %50 = arith.addf %45, %49 : vector<2x10x1xf32>
    %51 = vector.extract_strided_slice %1 {offsets = [0, 0, 8], sizes = [2, 10, 1], strides = [1, 1, 1]} : vector<2x10x10xf32> to vector<2x10x1xf32>
    %52 = vector.extract_strided_slice %3 {offsets = [0, 8, 0], sizes = [2, 1, 1], strides = [1, 1, 1]} : vector<2x10x1xf32> to vector<2x1x1xf32>
    %53 = vector.broadcast %52 : vector<2x1x1xf32> to vector<2x10x1xf32>
    %54 = arith.mulf %51, %53 : vector<2x10x1xf32>
    %55 = arith.addf %50, %54 : vector<2x10x1xf32>
    %56 = vector.extract_strided_slice %1 {offsets = [0, 0, 9], sizes = [2, 10, 1], strides = [1, 1, 1]} : vector<2x10x10xf32> to vector<2x10x1xf32>
    %57 = vector.extract_strided_slice %3 {offsets = [0, 9, 0], sizes = [2, 1, 1], strides = [1, 1, 1]} : vector<2x10x1xf32> to vector<2x1x1xf32>
    %58 = vector.broadcast %57 : vector<2x1x1xf32> to vector<2x10x1xf32>
    %59 = arith.mulf %56, %58 : vector<2x10x1xf32>
    %60 = arith.addf %55, %59 : vector<2x10x1xf32>
    %61 = vector.shape_cast %4 : vector<1x8xf32> to vector<1x1x8xf32>
    %62 = vector.broadcast %60 : vector<2x10x1xf32> to vector<2x10x8xf32>
    %63 = vector.broadcast %61 : vector<1x1x8xf32> to vector<2x10x8xf32>
    %64 = arith.mulf %62, %63 : vector<2x10x8xf32>
    %65 = vector.shape_cast %5 : vector<1x8xf32> to vector<1x1x8xf32>
    %66 = vector.broadcast %65 : vector<1x1x8xf32> to vector<2x10x8xf32>
    %67 = arith.addf %64, %66 : vector<2x10x8xf32>
    %cst = arith.constant 0.000000e+00 : f32
    %68 = vector.broadcast %cst : f32 to vector<2x10x8xf32>
    %69 = arith.maximumf %67, %68 : vector<2x10x8xf32>
    %70 = vector.extract_strided_slice %1 {offsets = [0, 0, 0], sizes = [2, 10, 1], strides = [1, 1, 1]} : vector<2x10x10xf32> to vector<2x10x1xf32>
    %71 = vector.extract_strided_slice %69 {offsets = [0, 0, 0], sizes = [2, 1, 8], strides = [1, 1, 1]} : vector<2x10x8xf32> to vector<2x1x8xf32>
    %72 = vector.broadcast %70 : vector<2x10x1xf32> to vector<2x10x8xf32>
    %73 = vector.broadcast %71 : vector<2x1x8xf32> to vector<2x10x8xf32>
    %74 = arith.mulf %72, %73 : vector<2x10x8xf32>
    %75 = vector.extract_strided_slice %1 {offsets = [0, 0, 1], sizes = [2, 10, 1], strides = [1, 1, 1]} : vector<2x10x10xf32> to vector<2x10x1xf32>
    %76 = vector.extract_strided_slice %69 {offsets = [0, 1, 0], sizes = [2, 1, 8], strides = [1, 1, 1]} : vector<2x10x8xf32> to vector<2x1x8xf32>
    %77 = vector.broadcast %75 : vector<2x10x1xf32> to vector<2x10x8xf32>
    %78 = vector.broadcast %76 : vector<2x1x8xf32> to vector<2x10x8xf32>
    %79 = arith.mulf %77, %78 : vector<2x10x8xf32>
    %80 = arith.addf %74, %79 : vector<2x10x8xf32>
    %81 = vector.extract_strided_slice %1 {offsets = [0, 0, 2], sizes = [2, 10, 1], strides = [1, 1, 1]} : vector<2x10x10xf32> to vector<2x10x1xf32>
    %82 = vector.extract_strided_slice %69 {offsets = [0, 2, 0], sizes = [2, 1, 8], strides = [1, 1, 1]} : vector<2x10x8xf32> to vector<2x1x8xf32>
    %83 = vector.broadcast %81 : vector<2x10x1xf32> to vector<2x10x8xf32>
    %84 = vector.broadcast %82 : vector<2x1x8xf32> to vector<2x10x8xf32>
    %85 = arith.mulf %83, %84 : vector<2x10x8xf32>
    %86 = arith.addf %80, %85 : vector<2x10x8xf32>
    %87 = vector.extract_strided_slice %1 {offsets = [0, 0, 3], sizes = [2, 10, 1], strides = [1, 1, 1]} : vector<2x10x10xf32> to vector<2x10x1xf32>
    %88 = vector.extract_strided_slice %69 {offsets = [0, 3, 0], sizes = [2, 1, 8], strides = [1, 1, 1]} : vector<2x10x8xf32> to vector<2x1x8xf32>
    %89 = vector.broadcast %87 : vector<2x10x1xf32> to vector<2x10x8xf32>
    %90 = vector.broadcast %88 : vector<2x1x8xf32> to vector<2x10x8xf32>
    %91 = arith.mulf %89, %90 : vector<2x10x8xf32>
    %92 = arith.addf %86, %91 : vector<2x10x8xf32>
    %93 = vector.extract_strided_slice %1 {offsets = [0, 0, 4], sizes = [2, 10, 1], strides = [1, 1, 1]} : vector<2x10x10xf32> to vector<2x10x1xf32>
    %94 = vector.extract_strided_slice %69 {offsets = [0, 4, 0], sizes = [2, 1, 8], strides = [1, 1, 1]} : vector<2x10x8xf32> to vector<2x1x8xf32>
    %95 = vector.broadcast %93 : vector<2x10x1xf32> to vector<2x10x8xf32>
    %96 = vector.broadcast %94 : vector<2x1x8xf32> to vector<2x10x8xf32>
    %97 = arith.mulf %95, %96 : vector<2x10x8xf32>
    %98 = arith.addf %92, %97 : vector<2x10x8xf32>
    %99 = vector.extract_strided_slice %1 {offsets = [0, 0, 5], sizes = [2, 10, 1], strides = [1, 1, 1]} : vector<2x10x10xf32> to vector<2x10x1xf32>
    %100 = vector.extract_strided_slice %69 {offsets = [0, 5, 0], sizes = [2, 1, 8], strides = [1, 1, 1]} : vector<2x10x8xf32> to vector<2x1x8xf32>
    %101 = vector.broadcast %99 : vector<2x10x1xf32> to vector<2x10x8xf32>
    %102 = vector.broadcast %100 : vector<2x1x8xf32> to vector<2x10x8xf32>
    %103 = arith.mulf %101, %102 : vector<2x10x8xf32>
    %104 = arith.addf %98, %103 : vector<2x10x8xf32>
    %105 = vector.extract_strided_slice %1 {offsets = [0, 0, 6], sizes = [2, 10, 1], strides = [1, 1, 1]} : vector<2x10x10xf32> to vector<2x10x1xf32>
    %106 = vector.extract_strided_slice %69 {offsets = [0, 6, 0], sizes = [2, 1, 8], strides = [1, 1, 1]} : vector<2x10x8xf32> to vector<2x1x8xf32>
    %107 = vector.broadcast %105 : vector<2x10x1xf32> to vector<2x10x8xf32>
    %108 = vector.broadcast %106 : vector<2x1x8xf32> to vector<2x10x8xf32>
    %109 = arith.mulf %107, %108 : vector<2x10x8xf32>
    %110 = arith.addf %104, %109 : vector<2x10x8xf32>
    %111 = vector.extract_strided_slice %1 {offsets = [0, 0, 7], sizes = [2, 10, 1], strides = [1, 1, 1]} : vector<2x10x10xf32> to vector<2x10x1xf32>
    %112 = vector.extract_strided_slice %69 {offsets = [0, 7, 0], sizes = [2, 1, 8], strides = [1, 1, 1]} : vector<2x10x8xf32> to vector<2x1x8xf32>
    %113 = vector.broadcast %111 : vector<2x10x1xf32> to vector<2x10x8xf32>
    %114 = vector.broadcast %112 : vector<2x1x8xf32> to vector<2x10x8xf32>
    %115 = arith.mulf %113, %114 : vector<2x10x8xf32>
    %116 = arith.addf %110, %115 : vector<2x10x8xf32>
    %117 = vector.extract_strided_slice %1 {offsets = [0, 0, 8], sizes = [2, 10, 1], strides = [1, 1, 1]} : vector<2x10x10xf32> to vector<2x10x1xf32>
    %118 = vector.extract_strided_slice %69 {offsets = [0, 8, 0], sizes = [2, 1, 8], strides = [1, 1, 1]} : vector<2x10x8xf32> to vector<2x1x8xf32>
    %119 = vector.broadcast %117 : vector<2x10x1xf32> to vector<2x10x8xf32>
    %120 = vector.broadcast %118 : vector<2x1x8xf32> to vector<2x10x8xf32>
    %121 = arith.mulf %119, %120 : vector<2x10x8xf32>
    %122 = arith.addf %116, %121 : vector<2x10x8xf32>
    %123 = vector.extract_strided_slice %1 {offsets = [0, 0, 9], sizes = [2, 10, 1], strides = [1, 1, 1]} : vector<2x10x10xf32> to vector<2x10x1xf32>
    %124 = vector.extract_strided_slice %69 {offsets = [0, 9, 0], sizes = [2, 1, 8], strides = [1, 1, 1]} : vector<2x10x8xf32> to vector<2x1x8xf32>
    %125 = vector.broadcast %123 : vector<2x10x1xf32> to vector<2x10x8xf32>
    %126 = vector.broadcast %124 : vector<2x1x8xf32> to vector<2x10x8xf32>
    %127 = arith.mulf %125, %126 : vector<2x10x8xf32>
    %128 = arith.addf %122, %127 : vector<2x10x8xf32>
    %129 = vector.extract_strided_slice %128 {offsets = [0, 0, 0], sizes = [2, 1, 8], strides = [1, 1, 1]} : vector<2x10x8xf32> to vector<2x1x8xf32>
    %130 = vector.shape_cast %129 : vector<2x1x8xf32> to vector<2x8xf32>
    %131 = vector.extract_strided_slice %6 {offsets = [0, 0, 0], sizes = [1, 8, 80], strides = [1, 1, 1]} : vector<10x8x80xf32> to vector<1x8x80xf32>
    %132 = vector.shape_cast %131 : vector<1x8x80xf32> to vector<8x80xf32>
    %cst_22 = arith.constant dense<0.000000e+00> : vector<2x80xf32>
    %133 = tpu.matmul %130, %132, %cst_22 {dimension_numbers = #tpu.dot_dimension_numbers<[1], [0], [0], [1], [0, 0, 1, 1], [], []>} : vector<2x8xf32>, vector<8x80xf32>, vector<2x80xf32> -> vector<2x80xf32>
    %134 = vector.extract_strided_slice %128 {offsets = [0, 1, 0], sizes = [2, 1, 8], strides = [1, 1, 1]} : vector<2x10x8xf32> to vector<2x1x8xf32>
    %135 = vector.shape_cast %134 : vector<2x1x8xf32> to vector<2x8xf32>
    %136 = vector.extract_strided_slice %6 {offsets = [1, 0, 0], sizes = [1, 8, 80], strides = [1, 1, 1]} : vector<10x8x80xf32> to vector<1x8x80xf32>
    %137 = vector.shape_cast %136 : vector<1x8x80xf32> to vector<8x80xf32>
    %cst_23 = arith.constant dense<0.000000e+00> : vector<2x80xf32>
    %138 = tpu.matmul %135, %137, %cst_23 {dimension_numbers = #tpu.dot_dimension_numbers<[1], [0], [0], [1], [0, 0, 1, 1], [], []>} : vector<2x8xf32>, vector<8x80xf32>, vector<2x80xf32> -> vector<2x80xf32>
    %139 = vector.extract_strided_slice %128 {offsets = [0, 2, 0], sizes = [2, 1, 8], strides = [1, 1, 1]} : vector<2x10x8xf32> to vector<2x1x8xf32>
    %140 = vector.shape_cast %139 : vector<2x1x8xf32> to vector<2x8xf32>
    %141 = vector.extract_strided_slice %6 {offsets = [2, 0, 0], sizes = [1, 8, 80], strides = [1, 1, 1]} : vector<10x8x80xf32> to vector<1x8x80xf32>
    %142 = vector.shape_cast %141 : vector<1x8x80xf32> to vector<8x80xf32>
    %cst_24 = arith.constant dense<0.000000e+00> : vector<2x80xf32>
    %143 = tpu.matmul %140, %142, %cst_24 {dimension_numbers = #tpu.dot_dimension_numbers<[1], [0], [0], [1], [0, 0, 1, 1], [], []>} : vector<2x8xf32>, vector<8x80xf32>, vector<2x80xf32> -> vector<2x80xf32>
    %144 = vector.extract_strided_slice %128 {offsets = [0, 3, 0], sizes = [2, 1, 8], strides = [1, 1, 1]} : vector<2x10x8xf32> to vector<2x1x8xf32>
    %145 = vector.shape_cast %144 : vector<2x1x8xf32> to vector<2x8xf32>
    %146 = vector.extract_strided_slice %6 {offsets = [3, 0, 0], sizes = [1, 8, 80], strides = [1, 1, 1]} : vector<10x8x80xf32> to vector<1x8x80xf32>
    %147 = vector.shape_cast %146 : vector<1x8x80xf32> to vector<8x80xf32>
    %cst_25 = arith.constant dense<0.000000e+00> : vector<2x80xf32>
    %148 = tpu.matmul %145, %147, %cst_25 {dimension_numbers = #tpu.dot_dimension_numbers<[1], [0], [0], [1], [0, 0, 1, 1], [], []>} : vector<2x8xf32>, vector<8x80xf32>, vector<2x80xf32> -> vector<2x80xf32>
    %149 = vector.extract_strided_slice %128 {offsets = [0, 4, 0], sizes = [2, 1, 8], strides = [1, 1, 1]} : vector<2x10x8xf32> to vector<2x1x8xf32>
    %150 = vector.shape_cast %149 : vector<2x1x8xf32> to vector<2x8xf32>
    %151 = vector.extract_strided_slice %6 {offsets = [4, 0, 0], sizes = [1, 8, 80], strides = [1, 1, 1]} : vector<10x8x80xf32> to vector<1x8x80xf32>
    %152 = vector.shape_cast %151 : vector<1x8x80xf32> to vector<8x80xf32>
    %cst_26 = arith.constant dense<0.000000e+00> : vector<2x80xf32>
    %153 = tpu.matmul %150, %152, %cst_26 {dimension_numbers = #tpu.dot_dimension_numbers<[1], [0], [0], [1], [0, 0, 1, 1], [], []>} : vector<2x8xf32>, vector<8x80xf32>, vector<2x80xf32> -> vector<2x80xf32>
    %154 = vector.extract_strided_slice %128 {offsets = [0, 5, 0], sizes = [2, 1, 8], strides = [1, 1, 1]} : vector<2x10x8xf32> to vector<2x1x8xf32>
    %155 = vector.shape_cast %154 : vector<2x1x8xf32> to vector<2x8xf32>
    %156 = vector.extract_strided_slice %6 {offsets = [5, 0, 0], sizes = [1, 8, 80], strides = [1, 1, 1]} : vector<10x8x80xf32> to vector<1x8x80xf32>
    %157 = vector.shape_cast %156 : vector<1x8x80xf32> to vector<8x80xf32>
    %cst_27 = arith.constant dense<0.000000e+00> : vector<2x80xf32>
    %158 = tpu.matmul %155, %157, %cst_27 {dimension_numbers = #tpu.dot_dimension_numbers<[1], [0], [0], [1], [0, 0, 1, 1], [], []>} : vector<2x8xf32>, vector<8x80xf32>, vector<2x80xf32> -> vector<2x80xf32>
    %159 = vector.extract_strided_slice %128 {offsets = [0, 6, 0], sizes = [2, 1, 8], strides = [1, 1, 1]} : vector<2x10x8xf32> to vector<2x1x8xf32>
    %160 = vector.shape_cast %159 : vector<2x1x8xf32> to vector<2x8xf32>
    %161 = vector.extract_strided_slice %6 {offsets = [6, 0, 0], sizes = [1, 8, 80], strides = [1, 1, 1]} : vector<10x8x80xf32> to vector<1x8x80xf32>
    %162 = vector.shape_cast %161 : vector<1x8x80xf32> to vector<8x80xf32>
    %cst_28 = arith.constant dense<0.000000e+00> : vector<2x80xf32>
    %163 = tpu.matmul %160, %162, %cst_28 {dimension_numbers = #tpu.dot_dimension_numbers<[1], [0], [0], [1], [0, 0, 1, 1], [], []>} : vector<2x8xf32>, vector<8x80xf32>, vector<2x80xf32> -> vector<2x80xf32>
    %164 = vector.extract_strided_slice %128 {offsets = [0, 7, 0], sizes = [2, 1, 8], strides = [1, 1, 1]} : vector<2x10x8xf32> to vector<2x1x8xf32>
    %165 = vector.shape_cast %164 : vector<2x1x8xf32> to vector<2x8xf32>
    %166 = vector.extract_strided_slice %6 {offsets = [7, 0, 0], sizes = [1, 8, 80], strides = [1, 1, 1]} : vector<10x8x80xf32> to vector<1x8x80xf32>
    %167 = vector.shape_cast %166 : vector<1x8x80xf32> to vector<8x80xf32>
    %cst_29 = arith.constant dense<0.000000e+00> : vector<2x80xf32>
    %168 = tpu.matmul %165, %167, %cst_29 {dimension_numbers = #tpu.dot_dimension_numbers<[1], [0], [0], [1], [0, 0, 1, 1], [], []>} : vector<2x8xf32>, vector<8x80xf32>, vector<2x80xf32> -> vector<2x80xf32>
    %169 = vector.extract_strided_slice %128 {offsets = [0, 8, 0], sizes = [2, 1, 8], strides = [1, 1, 1]} : vector<2x10x8xf32> to vector<2x1x8xf32>
    %170 = vector.shape_cast %169 : vector<2x1x8xf32> to vector<2x8xf32>
    %171 = vector.extract_strided_slice %6 {offsets = [8, 0, 0], sizes = [1, 8, 80], strides = [1, 1, 1]} : vector<10x8x80xf32> to vector<1x8x80xf32>
    %172 = vector.shape_cast %171 : vector<1x8x80xf32> to vector<8x80xf32>
    %cst_30 = arith.constant dense<0.000000e+00> : vector<2x80xf32>
    %173 = tpu.matmul %170, %172, %cst_30 {dimension_numbers = #tpu.dot_dimension_numbers<[1], [0], [0], [1], [0, 0, 1, 1], [], []>} : vector<2x8xf32>, vector<8x80xf32>, vector<2x80xf32> -> vector<2x80xf32>
    %174 = vector.extract_strided_slice %128 {offsets = [0, 9, 0], sizes = [2, 1, 8], strides = [1, 1, 1]} : vector<2x10x8xf32> to vector<2x1x8xf32>
    %175 = vector.shape_cast %174 : vector<2x1x8xf32> to vector<2x8xf32>
    %176 = vector.extract_strided_slice %6 {offsets = [9, 0, 0], sizes = [1, 8, 80], strides = [1, 1, 1]} : vector<10x8x80xf32> to vector<1x8x80xf32>
    %177 = vector.shape_cast %176 : vector<1x8x80xf32> to vector<8x80xf32>
    %cst_31 = arith.constant dense<0.000000e+00> : vector<2x80xf32>
    %178 = tpu.matmul %175, %177, %cst_31 {dimension_numbers = #tpu.dot_dimension_numbers<[1], [0], [0], [1], [0, 0, 1, 1], [], []>} : vector<2x8xf32>, vector<8x80xf32>, vector<2x80xf32> -> vector<2x80xf32>
    %179 = arith.addf %133, %138 : vector<2x80xf32>
    %180 = arith.addf %143, %148 : vector<2x80xf32>
    %181 = arith.addf %153, %158 : vector<2x80xf32>
    %182 = arith.addf %163, %168 : vector<2x80xf32>
    %183 = arith.addf %173, %178 : vector<2x80xf32>
    %184 = arith.addf %179, %180 : vector<2x80xf32>
    %185 = arith.addf %181, %182 : vector<2x80xf32>
    %186 = arith.addf %184, %185 : vector<2x80xf32>
    %187 = arith.addf %186, %183 : vector<2x80xf32>
    %188 = vector.broadcast %7 : vector<1x80xf32> to vector<2x80xf32>
    %189 = arith.addf %187, %188 : vector<2x80xf32>
    %cst_32 = arith.constant 0.000000e+00 : f32
    %190 = vector.broadcast %cst_32 : f32 to vector<2x80xf32>
    %191 = arith.maximumf %189, %190 : vector<2x80xf32>
    %cst_33 = arith.constant dense<0.000000e+00> : vector<2x16xf32>
    %192 = tpu.matmul %191, %8, %cst_33 {dimension_numbers = #tpu.dot_dimension_numbers<[1], [0], [0], [1], [0, 0, 1, 1], [], []>} : vector<2x80xf32>, vector<80x16xf32>, vector<2x16xf32> -> vector<2x16xf32>
    %193 = vector.broadcast %9 : vector<1x16xf32> to vector<2x16xf32>
    %194 = arith.addf %192, %193 : vector<2x16xf32>
    %cst_34 = arith.constant 0.000000e+00 : f32
    %195 = vector.broadcast %cst_34 : f32 to vector<2x16xf32>
    %196 = arith.maximumf %194, %195 : vector<2x16xf32>
    %cst_35 = arith.constant dense<0.000000e+00> : vector<2x128xf32>
    %197 = tpu.matmul %196, %10, %cst_35 {dimension_numbers = #tpu.dot_dimension_numbers<[1], [0], [0], [1], [0, 0, 1, 1], [], []>} : vector<2x16xf32>, vector<16x128xf32>, vector<2x128xf32> -> vector<2x128xf32>
    %198 = vector.broadcast %11 : vector<1x128xf32> to vector<2x128xf32>
    %199 = arith.addf %197, %198 : vector<2x128xf32>
    %c0_36 = arith.constant 0 : index
    %c0_37 = arith.constant 0 : index
    %200 = vector.load %arg11[%c0_36, %c0_37] : memref<2x128xf32, #tpu.memory_space<vmem>>, vector<2x128xf32>
    tpu.vector_store %arg11[%c0_36, %c0_37], %199 {strides = array<i32>} : memref<2x128xf32, #tpu.memory_space<vmem>>, vector<2x128xf32>,
    return
  }
  func.func @transform_0(%arg0: i32) -> (i32, i32, i32) {
    %c0_i32 = arith.constant 0 : i32
    %c0_i32_0 = arith.constant 0 : i32
    %c0_i32_1 = arith.constant 0 : i32
    return %arg0, %c0_i32, %c0_i32_0 : i32, i32, i32
  }
  func.func @transform_1(%arg0: i32) -> (i32, i32, i32) {
    %c0_i32 = arith.constant 0 : i32
    %c0_i32_0 = arith.constant 0 : i32
    %c0_i32_1 = arith.constant 0 : i32
    return %arg0, %c0_i32, %c0_i32_0 : i32, i32, i32
  }
  func.func @transform_2(%arg0: i32) -> (i32, i32) {
    %c0_i32 = arith.constant 0 : i32
    %c0_i32_0 = arith.constant 0 : i32
    %c0_i32_1 = arith.constant 0 : i32
    return %c0_i32, %c0_i32_0 : i32, i32
  }
  func.func @transform_3(%arg0: i32) -> (i32, i32) {
    %c0_i32 = arith.constant 0 : i32
    %c0_i32_0 = arith.constant 0 : i32
    %c0_i32_1 = arith.constant 0 : i32
    return %c0_i32, %c0_i32_0 : i32, i32
  }
  func.func @transform_4(%arg0: i32) -> (i32, i32, i32) {
    %c0_i32 = arith.constant 0 : i32
    %c0_i32_0 = arith.constant 0 : i32
    %c0_i32_1 = arith.constant 0 : i32
    %c0_i32_2 = arith.constant 0 : i32
    return %c0_i32, %c0_i32_0, %c0_i32_1 : i32, i32, i32
  }
  func.func @transform_5(%arg0: i32) -> (i32, i32) {
    %c0_i32 = arith.constant 0 : i32
    %c0_i32_0 = arith.constant 0 : i32
    %c0_i32_1 = arith.constant 0 : i32
    return %c0_i32, %c0_i32_0 : i32, i32
  }
  func.func @transform_6(%arg0: i32) -> (i32, i32) {
    %c0_i32 = arith.constant 0 : i32
    %c0_i32_0 = arith.constant 0 : i32
    %c0_i32_1 = arith.constant 0 : i32
    return %c0_i32, %c0_i32_0 : i32, i32
  }
  func.func @transform_7(%arg0: i32) -> (i32, i32) {
    %c0_i32 = arith.constant 0 : i32
    %c0_i32_0 = arith.constant 0 : i32
    %c0_i32_1 = arith.constant 0 : i32
    return %c0_i32, %c0_i32_0 : i32, i32
  }
  func.func @transform_8(%arg0: i32) -> (i32, i32) {
    %c0_i32 = arith.constant 0 : i32
    %c0_i32_0 = arith.constant 0 : i32
    %c0_i32_1 = arith.constant 0 : i32
    return %c0_i32, %c0_i32_0 : i32, i32
  }
  func.func @transform_9(%arg0: i32) -> (i32, i32) {
    %c0_i32 = arith.constant 0 : i32
    %c0_i32_0 = arith.constant 0 : i32
    %c0_i32_1 = arith.constant 0 : i32
    return %c0_i32, %c0_i32_0 : i32, i32
  }
  func.func @transform_10(%arg0: i32) -> (i32, i32) {
    %c0_i32 = arith.constant 0 : i32
    %c0_i32_0 = arith.constant 0 : i32
    return %arg0, %c0_i32 : i32, i32
  }
}

</mosaic_0001>

<llo_original>
// kernel: gcn_forward.1
$region0: #{gcn_forward.1}
  #allocation0 [shape = 'u32[]', space=smem, size = 0x4, offset = 0x4, fixed_abs, tag = 'smem constant byte address 0x4 - core index']
  #allocation1 [shape = 'u32[144,128]{1,0:T(1,128)}', space=vmem, size = 0x12000, scoped, tag = 'internal scratch']
  %s0 = inlined_call_operand.vmem [shape: bf16[2,10,10], index: 0, kind: input, shape index: {}]
  %s1 = inlined_call_operand.vmem [shape: bf16[2,10,1], index: 1, kind: input, shape index: {}]
  %s2 = inlined_call_operand.vmem [shape: f32[1,8], index: 2, kind: input, shape index: {}]
  %s3 = inlined_call_operand.vmem [shape: f32[1,8], index: 3, kind: input, shape index: {}]
  %s4 = inlined_call_operand.vmem [shape: f32[10,8,80], index: 4, kind: input, shape index: {}]
  %s5 = inlined_call_operand.vmem [shape: f32[1,80], index: 5, kind: input, shape index: {}]
  %s6 = inlined_call_operand.vmem [shape: f32[80,16], index: 6, kind: input, shape index: {}]
  %s7 = inlined_call_operand.vmem [shape: f32[1,16], index: 7, kind: input, shape index: {}]
  %s8 = inlined_call_operand.vmem [shape: f32[16,128], index: 8, kind: input, shape index: {}]
  %s9 = inlined_call_operand.vmem [shape: f32[1,128], index: 9, kind: input, shape index: {}]
  %s10 = inlined_call_operand.hbm [shape: f32[2,128], index: 10, kind: output, shape index: {}]
  %s11 = sld [smem:[#allocation0]]
  $region50: #{gcn_forward.1} parent=0
    _
  %s13 = ssub.s32 1, %s11
  %s14 = scalar_select 0, %s13, %s11
  $region1: #{gcn_forward.1} parent=0
    #allocation2 [shape = 'u8[1024]{0}', space=vmem, size = 0x400, scoped, tag = 'output window, operand 0, single buffered']
    #allocation3 [shape = 's32[1]{0}', space=sflag, size = 0x4, scoped, tag = 'scoped memory for gcn_forward.1']
    %15 = vsyncpa [#allocation3], 0
    // Predicated region
    $region2: #{gcn_forward.1} parent=1 // pred_check
      _
    $region3: #{gcn_forward.1} parent=1 // pred_check_branch
      %17 = sbr.rel (0) target = $region5
    $region4: #{gcn_forward.1} parent=1 // pred_region
      _
    $region5: #{gcn_forward.1} parent=1 // pred_fallthru
      _
    // Predicated region
    $region6: #{gcn_forward.1} parent=1 // pred_check
      _
    $region7: #{gcn_forward.1} parent=1 // pred_check_branch
      %19 = sbr.rel (0) target = $region9
    $region8: #{gcn_forward.1} parent=1 // pred_region
      _
    $region9: #{gcn_forward.1} parent=1 // pred_fallthru
      _
    // Predicated region
    $region10: #{gcn_forward.1} parent=1 // pred_check
      _
    $region11: #{gcn_forward.1} parent=1 // pred_check_branch
      %21 = sbr.rel (0) target = $region13
    $region12: #{gcn_forward.1} parent=1 // pred_region
      _
    $region13: #{gcn_forward.1} parent=1 // pred_fallthru
      _
    // Predicated region
    $region14: #{gcn_forward.1} parent=1 // pred_check
      _
    $region15: #{gcn_forward.1} parent=1 // pred_check_branch
      %23 = sbr.rel (0) target = $region17
    $region16: #{gcn_forward.1} parent=1 // pred_region
      _
    $region17: #{gcn_forward.1} parent=1 // pred_fallthru
      _
    // Predicated region
    $region18: #{gcn_forward.1} parent=1 // pred_check
      _
    $region19: #{gcn_forward.1} parent=1 // pred_check_branch
      %25 = sbr.rel (0) target = $region21
    $region20: #{gcn_forward.1} parent=1 // pred_region
      _
    $region21: #{gcn_forward.1} parent=1 // pred_fallthru
      _
    // Predicated region
    $region22: #{gcn_forward.1} parent=1 // pred_check
      _
    $region23: #{gcn_forward.1} parent=1 // pred_check_branch
      %27 = sbr.rel (0) target = $region25
    $region24: #{gcn_forward.1} parent=1 // pred_region
      _
    $region25: #{gcn_forward.1} parent=1 // pred_fallthru
      _
    // Predicated region
    $region26: #{gcn_forward.1} parent=1 // pred_check
      _
    $region27: #{gcn_forward.1} parent=1 // pred_check_branch
      %29 = sbr.rel (0) target = $region29
    $region28: #{gcn_forward.1} parent=1 // pred_region
      _
    $region29: #{gcn_forward.1} parent=1 // pred_fallthru
      _
    // Predicated region
    $region30: #{gcn_forward.1} parent=1 // pred_check
      _
    $region31: #{gcn_forward.1} parent=1 // pred_check_branch
      %31 = sbr.rel (0) target = $region33
    $region32: #{gcn_forward.1} parent=1 // pred_region
      _
    $region33: #{gcn_forward.1} parent=1 // pred_fallthru
      _
    // Predicated region
    $region34: #{gcn_forward.1} parent=1 // pred_check
      _
    $region35: #{gcn_forward.1} parent=1 // pred_check_branch
      %33 = sbr.rel (0) target = $region37
    $region36: #{gcn_forward.1} parent=1 // pred_region
      _
    $region37: #{gcn_forward.1} parent=1 // pred_fallthru
      _
    // Predicated region
    $region38: #{gcn_forward.1} parent=1 // pred_check
      _
    $region39: #{gcn_forward.1} parent=1 // pred_check_branch
      %35 = sbr.rel (0) target = $region41
    $region40: #{gcn_forward.1} parent=1 // pred_region
      _
    $region41: #{gcn_forward.1} parent=1 // pred_fallthru
      _
    %v36 = vld [vmem:[%s0] sm:$0xf]
    %v37 = vld [vmem:[%s0 + $0x4] sm:$0x1]
    %v38 = vld [vmem:[%s0 + $0x8] sm:$0xf]
    %v39 = vld [vmem:[%s0 + $0xc] sm:$0x1]
    %v40 = vunpack.c.l.bf16 %v36
    %v41 = vunpack.c.l.bf16 %v37
    %v42 = vunpack.c.l.bf16 %v38
    %v43 = vunpack.c.l.bf16 %v39
    %v44 = vld [vmem:[%s1] sm:$0xf]
    %v45 = vld [vmem:[%s1 + $0x4] sm:$0x1]
    %v46 = vld [vmem:[%s1 + $0x8] sm:$0xf]
    %v47 = vld [vmem:[%s1 + $0xc] sm:$0x1]
    %v48 = vunpack.c.l.bf16 %v44
    %v49 = vunpack.c.l.bf16 %v45
    %v50 = vunpack.c.l.bf16 %v46
    %v51 = vunpack.c.l.bf16 %v47
    %v52 = vld [vmem:[%s2] sm:$0x1]
    %v53 = vld [vmem:[%s3] sm:$0x1]
    %v54 = vld [vmem:[%s4] sm:$0xff]
    %v55 = vld [vmem:[%s4 + $0x8] sm:$0xff]
    %v56 = vld [vmem:[%s4 + $0x10] sm:$0xff]
    %v57 = vld [vmem:[%s4 + $0x18] sm:$0xff]
    %v58 = vld [vmem:[%s4 + $0x20] sm:$0xff]
    %v59 = vld [vmem:[%s4 + $0x28] sm:$0xff]
    %v60 = vld [vmem:[%s4 + $0x30] sm:$0xff]
    %v61 = vld [vmem:[%s4 + $0x38] sm:$0xff]
    %v62 = vld [vmem:[%s4 + $0x40] sm:$0xff]
    %v63 = vld [vmem:[%s4 + $0x48] sm:$0xff]
    %v64 = vld [vmem:[%s5] sm:$0x1]
    %v65 = vld [vmem:[%s6] sm:$0xff]
    %v66 = vld [vmem:[%s6 + $0x8] sm:$0xff]
    %v67 = vld [vmem:[%s6 + $0x10] sm:$0xff]
    %v68 = vld [vmem:[%s6 + $0x18] sm:$0xff]
    %v69 = vld [vmem:[%s6 + $0x20] sm:$0xff]
    %v70 = vld [vmem:[%s6 + $0x28] sm:$0xff]
    %v71 = vld [vmem:[%s6 + $0x30] sm:$0xff]
    %v72 = vld [vmem:[%s6 + $0x38] sm:$0xff]
    %v73 = vld [vmem:[%s6 + $0x40] sm:$0xff]
    %v74 = vld [vmem:[%s6 + $0x48] sm:$0xff]
    %v75 = vld [vmem:[%s7] sm:$0x1]
    %v76 = vld [vmem:[%s8] sm:$0xff]
    %v77 = vld [vmem:[%s8 + $0x8] sm:$0xff]
    %v78 = vld [vmem:[%s9] sm:$0x1]
    %v79 = vlaneseq
    %v80 = vshrl.u32 %v79, 7
    %v81 = vsub.s32 0, %v80
    %v82 = vrot.slane %v48, %v81
    %v83 = vlaneseq
    %v84 = vshrl.u32 %v83, 7
    %v85 = vsub.s32 0, %v84
    %v86 = vrot.slane %v50, %v85
    %v87 = vmul.f32 %v40, %v82
    %v88 = vmul.f32 %v41, %v82
    %v89 = vmul.f32 %v42, %v86
    %v90 = vmul.f32 %v43, %v86
    %v91 = vlaneseq
    %v92 = vshrl.u32 %v91, 7
    %v93 = vsub.s32 1, %v92
    %v94 = vrot.slane %v48, %v93
    %v95 = vlaneseq
    %v96 = vshrl.u32 %v95, 7
    %v97 = vsub.s32 1, %v96
    %v98 = vrot.slane %v50, %v97
    %101 = vrot.lane.b32.xlu0 %v94, 1
    %v102 = vpop.permute.xlu0 %101
    %103 = vrot.lane.b32.xlu0 %v98, 1
    %v104 = vpop.permute.xlu0 %103
    %v107 = vmul.f32 %v40, %v102
    %v108 = vmul.f32 %v41, %v102
    %v109 = vmul.f32 %v42, %v104
    %v110 = vmul.f32 %v43, %v104
    %115 = vrot.lane.b32.xlu0 %v107, 127
    %v116 = vpop.permute.xlu0 %115
    %117 = vrot.lane.b32.xlu0 %v108, 127
    %v118 = vpop.permute.xlu0 %117
    %119 = vrot.lane.b32.xlu0 %v109, 127
    %v120 = vpop.permute.xlu0 %119
    %121 = vrot.lane.b32.xlu0 %v110, 127
    %v122 = vpop.permute.xlu0 %121
    %v127 = vadd.f32 %v87, %v116
    %v128 = vadd.f32 %v88, %v118
    %v129 = vadd.f32 %v89, %v120
    %v130 = vadd.f32 %v90, %v122
    %v131 = vlaneseq
    %v132 = vshrl.u32 %v131, 7
    %v133 = vsub.s32 2, %v132
    %v134 = vrot.slane %v48, %v133
    %v135 = vlaneseq
    %v136 = vshrl.u32 %v135, 7
    %v137 = vsub.s32 2, %v136
    %v138 = vrot.slane %v50, %v137
    %141 = vrot.lane.b32.xlu0 %v134, 2
    %v142 = vpop.permute.xlu0 %141
    %143 = vrot.lane.b32.xlu0 %v138, 2
    %v144 = vpop.permute.xlu0 %143
    %v147 = vmul.f32 %v40, %v142
    %v148 = vmul.f32 %v41, %v142
    %v149 = vmul.f32 %v42, %v144
    %v150 = vmul.f32 %v43, %v144
    %155 = vrot.lane.b32.xlu0 %v147, 126
    %v156 = vpop.permute.xlu0 %155
    %157 = vrot.lane.b32.xlu0 %v148, 126
    %v158 = vpop.permute.xlu0 %157
    %159 = vrot.lane.b32.xlu0 %v149, 126
    %v160 = vpop.permute.xlu0 %159
    %161 = vrot.lane.b32.xlu0 %v150, 126
    %v162 = vpop.permute.xlu0 %161
    %v167 = vadd.f32 %v127, %v156
    %v168 = vadd.f32 %v128, %v158
    %v169 = vadd.f32 %v129, %v160
    %v170 = vadd.f32 %v130, %v162
    %v171 = vlaneseq
    %v172 = vshrl.u32 %v171, 7
    %v173 = vsub.s32 3, %v172
    %v174 = vrot.slane %v48, %v173
    %v175 = vlaneseq
    %v176 = vshrl.u32 %v175, 7
    %v177 = vsub.s32 3, %v176
    %v178 = vrot.slane %v50, %v177
    %181 = vrot.lane.b32.xlu0 %v174, 3
    %v182 = vpop.permute.xlu0 %181
    %183 = vrot.lane.b32.xlu0 %v178, 3
    %v184 = vpop.permute.xlu0 %183
    %v187 = vmul.f32 %v40, %v182
    %v188 = vmul.f32 %v41, %v182
    %v189 = vmul.f32 %v42, %v184
    %v190 = vmul.f32 %v43, %v184
    %195 = vrot.lane.b32.xlu0 %v187, 125
    %v196 = vpop.permute.xlu0 %195
    %197 = vrot.lane.b32.xlu0 %v188, 125
    %v198 = vpop.permute.xlu0 %197
    %199 = vrot.lane.b32.xlu0 %v189, 125
    %v200 = vpop.permute.xlu0 %199
    %201 = vrot.lane.b32.xlu0 %v190, 125
    %v202 = vpop.permute.xlu0 %201
    %v207 = vadd.f32 %v167, %v196
    %v208 = vadd.f32 %v168, %v198
    %v209 = vadd.f32 %v169, %v200
    %v210 = vadd.f32 %v170, %v202
    %v211 = vlaneseq
    %v212 = vshrl.u32 %v211, 7
    %v213 = vsub.s32 4, %v212
    %v214 = vrot.slane %v48, %v213
    %v215 = vlaneseq
    %v216 = vshrl.u32 %v215, 7
    %v217 = vsub.s32 4, %v216
    %v218 = vrot.slane %v50, %v217
    %221 = vrot.lane.b32.xlu0 %v214, 4
    %v222 = vpop.permute.xlu0 %221
    %223 = vrot.lane.b32.xlu0 %v218, 4
    %v224 = vpop.permute.xlu0 %223
    %v227 = vmul.f32 %v40, %v222
    %v228 = vmul.f32 %v41, %v222
    %v229 = vmul.f32 %v42, %v224
    %v230 = vmul.f32 %v43, %v224
    %235 = vrot.lane.b32.xlu0 %v227, 124
    %v236 = vpop.permute.xlu0 %235
    %237 = vrot.lane.b32.xlu0 %v228, 124
    %v238 = vpop.permute.xlu0 %237
    %239 = vrot.lane.b32.xlu0 %v229, 124
    %v240 = vpop.permute.xlu0 %239
    %241 = vrot.lane.b32.xlu0 %v230, 124
    %v242 = vpop.permute.xlu0 %241
    %v247 = vadd.f32 %v207, %v236
    %v248 = vadd.f32 %v208, %v238
    %v249 = vadd.f32 %v209, %v240
    %v250 = vadd.f32 %v210, %v242
    %v251 = vlaneseq
    %v252 = vshrl.u32 %v251, 7
    %v253 = vsub.s32 5, %v252
    %v254 = vrot.slane %v48, %v253
    %v255 = vlaneseq
    %v256 = vshrl.u32 %v255, 7
    %v257 = vsub.s32 5, %v256
    %v258 = vrot.slane %v50, %v257
    %261 = vrot.lane.b32.xlu0 %v254, 5
    %v262 = vpop.permute.xlu0 %261
    %263 = vrot.lane.b32.xlu0 %v258, 5
    %v264 = vpop.permute.xlu0 %263
    %v267 = vmul.f32 %v40, %v262
    %v268 = vmul.f32 %v41, %v262
    %v269 = vmul.f32 %v42, %v264
    %v270 = vmul.f32 %v43, %v264
    %275 = vrot.lane.b32.xlu0 %v267, 123
    %v276 = vpop.permute.xlu0 %275
    %277 = vrot.lane.b32.xlu0 %v268, 123
    %v278 = vpop.permute.xlu0 %277
    %279 = vrot.lane.b32.xlu0 %v269, 123
    %v280 = vpop.permute.xlu0 %279
    %281 = vrot.lane.b32.xlu0 %v270, 123
    %v282 = vpop.permute.xlu0 %281
    %v287 = vadd.f32 %v247, %v276
    %v288 = vadd.f32 %v248, %v278
    %v289 = vadd.f32 %v249, %v280
    %v290 = vadd.f32 %v250, %v282
    %v291 = vlaneseq
    %v292 = vshrl.u32 %v291, 7
    %v293 = vsub.s32 6, %v292
    %v294 = vrot.slane %v48, %v293
    %v295 = vlaneseq
    %v296 = vshrl.u32 %v295, 7
    %v297 = vsub.s32 6, %v296
    %v298 = vrot.slane %v50, %v297
    %301 = vrot.lane.b32.xlu0 %v294, 6
    %v302 = vpop.permute.xlu0 %301
    %303 = vrot.lane.b32.xlu0 %v298, 6
    %v304 = vpop.permute.xlu0 %303
    %v307 = vmul.f32 %v40, %v302
    %v308 = vmul.f32 %v41, %v302
    %v309 = vmul.f32 %v42, %v304
    %v310 = vmul.f32 %v43, %v304
    %315 = vrot.lane.b32.xlu0 %v307, 122
    %v316 = vpop.permute.xlu0 %315
    %317 = vrot.lane.b32.xlu0 %v308, 122
    %v318 = vpop.permute.xlu0 %317
    %319 = vrot.lane.b32.xlu0 %v309, 122
    %v320 = vpop.permute.xlu0 %319
    %321 = vrot.lane.b32.xlu0 %v310, 122
    %v322 = vpop.permute.xlu0 %321
    %v327 = vadd.f32 %v287, %v316
    %v328 = vadd.f32 %v288, %v318
    %v329 = vadd.f32 %v289, %v320
    %v330 = vadd.f32 %v290, %v322
    %v331 = vlaneseq
    %v332 = vshrl.u32 %v331, 7
    %v333 = vsub.s32 7, %v332
    %v334 = vrot.slane %v48, %v333
    %v335 = vlaneseq
    %v336 = vshrl.u32 %v335, 7
    %v337 = vsub.s32 7, %v336
    %v338 = vrot.slane %v50, %v337
    %341 = vrot.lane.b32.xlu0 %v334, 7
    %v342 = vpop.permute.xlu0 %341
    %343 = vrot.lane.b32.xlu0 %v338, 7
    %v344 = vpop.permute.xlu0 %343
    %v347 = vmul.f32 %v40, %v342
    %v348 = vmul.f32 %v41, %v342
    %v349 = vmul.f32 %v42, %v344
    %v350 = vmul.f32 %v43, %v344
    %355 = vrot.lane.b32.xlu0 %v347, 121
    %v356 = vpop.permute.xlu0 %355
    %357 = vrot.lane.b32.xlu0 %v348, 121
    %v358 = vpop.permute.xlu0 %357
    %359 = vrot.lane.b32.xlu0 %v349, 121
    %v360 = vpop.permute.xlu0 %359
    %361 = vrot.lane.b32.xlu0 %v350, 121
    %v362 = vpop.permute.xlu0 %361
    %v367 = vadd.f32 %v327, %v356
    %v368 = vadd.f32 %v328, %v358
    %v369 = vadd.f32 %v329, %v360
    %v370 = vadd.f32 %v330, %v362
    %v371 = vlaneseq
    %v372 = vshrl.u32 %v371, 7
    %v373 = vsub.s32 0, %v372
    %v374 = vrot.slane %v49, %v373
    %v375 = vlaneseq
    %v376 = vshrl.u32 %v375, 7
    %v377 = vsub.s32 0, %v376
    %v378 = vrot.slane %v51, %v377
    %381 = vrot.lane.b32.xlu0 %v374, 8
    %v382 = vpop.permute.xlu0 %381
    %383 = vrot.lane.b32.xlu0 %v378, 8
    %v384 = vpop.permute.xlu0 %383
    %v387 = vmul.f32 %v40, %v382
    %v388 = vmul.f32 %v41, %v382
    %v389 = vmul.f32 %v42, %v384
    %v390 = vmul.f32 %v43, %v384
    %395 = vrot.lane.b32.xlu0 %v387, 120
    %v396 = vpop.permute.xlu0 %395
    %397 = vrot.lane.b32.xlu0 %v388, 120
    %v398 = vpop.permute.xlu0 %397
    %399 = vrot.lane.b32.xlu0 %v389, 120
    %v400 = vpop.permute.xlu0 %399
    %401 = vrot.lane.b32.xlu0 %v390, 120
    %v402 = vpop.permute.xlu0 %401
    %v407 = vadd.f32 %v367, %v396
    %v408 = vadd.f32 %v368, %v398
    %v409 = vadd.f32 %v369, %v400
    %v410 = vadd.f32 %v370, %v402
    %v411 = vlaneseq
    %v412 = vshrl.u32 %v411, 7
    %v413 = vsub.s32 1, %v412
    %v414 = vrot.slane %v49, %v413
    %v415 = vlaneseq
    %v416 = vshrl.u32 %v415, 7
    %v417 = vsub.s32 1, %v416
    %v418 = vrot.slane %v51, %v417
    %421 = vrot.lane.b32.xlu0 %v414, 9
    %v422 = vpop.permute.xlu0 %421
    %423 = vrot.lane.b32.xlu0 %v418, 9
    %v424 = vpop.permute.xlu0 %423
    %v427 = vmul.f32 %v40, %v422
    %v428 = vmul.f32 %v41, %v422
    %v429 = vmul.f32 %v42, %v424
    %v430 = vmul.f32 %v43, %v424
    %435 = vrot.lane.b32.xlu0 %v427, 119
    %v436 = vpop.permute.xlu0 %435
    %437 = vrot.lane.b32.xlu0 %v428, 119
    %v438 = vpop.permute.xlu0 %437
    %439 = vrot.lane.b32.xlu0 %v429, 119
    %v440 = vpop.permute.xlu0 %439
    %441 = vrot.lane.b32.xlu0 %v430, 119
    %v442 = vpop.permute.xlu0 %441
    %v447 = vadd.f32 %v407, %v436
    %v448 = vadd.f32 %v408, %v438
    %v449 = vadd.f32 %v409, %v440
    %v450 = vadd.f32 %v410, %v442
    %452 = vset.pattern.permute.xlu0 0
    %453 = vperm.xlu0 %452, %v447
    %v454 = vpop.permute.xlu0 %453
    %457 = vset.pattern.permute.xlu0 0
    %458 = vperm.xlu0 %457, %v448
    %v459 = vpop.permute.xlu0 %458
    %462 = vset.pattern.permute.xlu0 0
    %463 = vperm.xlu0 %462, %v449
    %v464 = vpop.permute.xlu0 %463
    %467 = vset.pattern.permute.xlu0 0
    %468 = vperm.xlu0 %467, %v450
    %v469 = vpop.permute.xlu0 %468
    %v472 = vlaneseq
    %v473 = vshrl.u32 %v472, 7
    %v474 = vsub.s32 0, %v473
    %v475 = vrot.slane %v52, %v474
    %v477 = vmul.f32 %v454, %v475
    %v478 = vmul.f32 %v459, %v475
    %v479 = vmul.f32 %v464, %v475
    %v480 = vmul.f32 %v469, %v475
    %v482 = vlaneseq
    %v483 = vshrl.u32 %v482, 7
    %v484 = vsub.s32 0, %v483
    %v485 = vrot.slane %v53, %v484
    %v487 = vadd.f32 %v477, %v485
    %v488 = vadd.f32 %v478, %v485
    %v489 = vadd.f32 %v479, %v485
    %v490 = vadd.f32 %v480, %v485
    %v491 = vmax.f32 %v487, 0.0
    %v492 = vmax.f32 %v488, 0.0
    %v493 = vmax.f32 %v489, 0.0
    %v494 = vmax.f32 %v490, 0.0
    %496 = vset.pattern.permute.xlu0 0
    %497 = vperm.xlu0 %496, %v40
    %v498 = vpop.permute.xlu0 %497
    %501 = vset.pattern.permute.xlu0 0
    %502 = vperm.xlu0 %501, %v41
    %v503 = vpop.permute.xlu0 %502
    %506 = vset.pattern.permute.xlu0 0
    %507 = vperm.xlu0 %506, %v42
    %v508 = vpop.permute.xlu0 %507
    %511 = vset.pattern.permute.xlu0 0
    %512 = vperm.xlu0 %511, %v43
    %v513 = vpop.permute.xlu0 %512
    %v515 = vlaneseq
    %v516 = vshrl.u32 %v515, 7
    %v517 = vsub.s32 0, %v516
    %v518 = vrot.slane %v491, %v517
    %v519 = vlaneseq
    %v520 = vshrl.u32 %v519, 7
    %v521 = vsub.s32 0, %v520
    %v522 = vrot.slane %v493, %v521
    %v523 = vmul.f32 %v498, %v518
    %v524 = vmul.f32 %v503, %v518
    %v525 = vmul.f32 %v508, %v522
    %v526 = vmul.f32 %v513, %v522
    %527 = vset.pattern.permute.xlu0 1
    %528 = vperm.xlu0 %527, %v40
    %v529 = vpop.permute.xlu0 %528
    %531 = vset.pattern.permute.xlu0 1
    %532 = vperm.xlu0 %531, %v41
    %v533 = vpop.permute.xlu0 %532
    %535 = vset.pattern.permute.xlu0 1
    %536 = vperm.xlu0 %535, %v42
    %v537 = vpop.permute.xlu0 %536
    %539 = vset.pattern.permute.xlu0 1
    %540 = vperm.xlu0 %539, %v43
    %v541 = vpop.permute.xlu0 %540
    %v543 = vlaneseq
    %v544 = vshrl.u32 %v543, 7
    %v545 = vsub.s32 1, %v544
    %v546 = vrot.slane %v491, %v545
    %v547 = vlaneseq
    %v548 = vshrl.u32 %v547, 7
    %v549 = vsub.s32 1, %v548
    %v550 = vrot.slane %v493, %v549
    %v551 = vmul.f32 %v529, %v546
    %v552 = vmul.f32 %v533, %v546
    %v553 = vmul.f32 %v537, %v550
    %v554 = vmul.f32 %v541, %v550
    %v555 = vadd.f32 %v523, %v551
    %v556 = vadd.f32 %v524, %v552
    %v557 = vadd.f32 %v525, %v553
    %v558 = vadd.f32 %v526, %v554
    %559 = vset.pattern.permute.xlu0 2
    %560 = vperm.xlu0 %559, %v40
    %v561 = vpop.permute.xlu0 %560
    %563 = vset.pattern.permute.xlu0 2
    %564 = vperm.xlu0 %563, %v41
    %v565 = vpop.permute.xlu0 %564
    %567 = vset.pattern.permute.xlu0 2
    %568 = vperm.xlu0 %567, %v42
    %v569 = vpop.permute.xlu0 %568
    %571 = vset.pattern.permute.xlu0 2
    %572 = vperm.xlu0 %571, %v43
    %v573 = vpop.permute.xlu0 %572
    %v575 = vlaneseq
    %v576 = vshrl.u32 %v575, 7
    %v577 = vsub.s32 2, %v576
    %v578 = vrot.slane %v491, %v577
    %v579 = vlaneseq
    %v580 = vshrl.u32 %v579, 7
    %v581 = vsub.s32 2, %v580
    %v582 = vrot.slane %v493, %v581
    %v583 = vmul.f32 %v561, %v578
    %v584 = vmul.f32 %v565, %v578
    %v585 = vmul.f32 %v569, %v582
    %v586 = vmul.f32 %v573, %v582
    %v587 = vadd.f32 %v555, %v583
    %v588 = vadd.f32 %v556, %v584
    %v589 = vadd.f32 %v557, %v585
    %v590 = vadd.f32 %v558, %v586
    %591 = vset.pattern.permute.xlu0 3
    %592 = vperm.xlu0 %591, %v40
    %v593 = vpop.permute.xlu0 %592
    %595 = vset.pattern.permute.xlu0 3
    %596 = vperm.xlu0 %595, %v41
    %v597 = vpop.permute.xlu0 %596
    %599 = vset.pattern.permute.xlu0 3
    %600 = vperm.xlu0 %599, %v42
    %v601 = vpop.permute.xlu0 %600
    %603 = vset.pattern.permute.xlu0 3
    %604 = vperm.xlu0 %603, %v43
    %v605 = vpop.permute.xlu0 %604
    %v607 = vlaneseq
    %v608 = vshrl.u32 %v607, 7
    %v609 = vsub.s32 3, %v608
    %v610 = vrot.slane %v491, %v609
    %v611 = vlaneseq
    %v612 = vshrl.u32 %v611, 7
    %v613 = vsub.s32 3, %v612
    %v614 = vrot.slane %v493, %v613
    %v615 = vmul.f32 %v593, %v610
    %v616 = vmul.f32 %v597, %v610
    %v617 = vmul.f32 %v601, %v614
    %v618 = vmul.f32 %v605, %v614
    %v619 = vadd.f32 %v587, %v615
    %v620 = vadd.f32 %v588, %v616
    %v621 = vadd.f32 %v589, %v617
    %v622 = vadd.f32 %v590, %v618
    %623 = vset.pattern.permute.xlu0 4
    %624 = vperm.xlu0 %623, %v40
    %v625 = vpop.permute.xlu0 %624
    %627 = vset.pattern.permute.xlu0 4
    %628 = vperm.xlu0 %627, %v41
    %v629 = vpop.permute.xlu0 %628
    %631 = vset.pattern.permute.xlu0 4
    %632 = vperm.xlu0 %631, %v42
    %v633 = vpop.permute.xlu0 %632
    %635 = vset.pattern.permute.xlu0 4
    %636 = vperm.xlu0 %635, %v43
    %v637 = vpop.permute.xlu0 %636
    %v639 = vlaneseq
    %v640 = vshrl.u32 %v639, 7
    %v641 = vsub.s32 4, %v640
    %v642 = vrot.slane %v491, %v641
    %v643 = vlaneseq
    %v644 = vshrl.u32 %v643, 7
    %v645 = vsub.s32 4, %v644
    %v646 = vrot.slane %v493, %v645
    %v647 = vmul.f32 %v625, %v642
    %v648 = vmul.f32 %v629, %v642
    %v649 = vmul.f32 %v633, %v646
    %v650 = vmul.f32 %v637, %v646
    %v651 = vadd.f32 %v619, %v647
    %v652 = vadd.f32 %v620, %v648
    %v653 = vadd.f32 %v621, %v649
    %v654 = vadd.f32 %v622, %v650
    %655 = vset.pattern.permute.xlu0 5
    %656 = vperm.xlu0 %655, %v40
    %v657 = vpop.permute.xlu0 %656
    %659 = vset.pattern.permute.xlu0 5
    %660 = vperm.xlu0 %659, %v41
    %v661 = vpop.permute.xlu0 %660
    %663 = vset.pattern.permute.xlu0 5
    %664 = vperm.xlu0 %663, %v42
    %v665 = vpop.permute.xlu0 %664
    %667 = vset.pattern.permute.xlu0 5
    %668 = vperm.xlu0 %667, %v43
    %v669 = vpop.permute.xlu0 %668
    %v671 = vlaneseq
    %v672 = vshrl.u32 %v671, 7
    %v673 = vsub.s32 5, %v672
    %v674 = vrot.slane %v491, %v673
    %v675 = vlaneseq
    %v676 = vshrl.u32 %v675, 7
    %v677 = vsub.s32 5, %v676
    %v678 = vrot.slane %v493, %v677
    %v679 = vmul.f32 %v657, %v674
    %v680 = vmul.f32 %v661, %v674
    %v681 = vmul.f32 %v665, %v678
    %v682 = vmul.f32 %v669, %v678
    %v683 = vadd.f32 %v651, %v679
    %v684 = vadd.f32 %v652, %v680
    %v685 = vadd.f32 %v653, %v681
    %v686 = vadd.f32 %v654, %v682
    %687 = vset.pattern.permute.xlu0 6
    %688 = vperm.xlu0 %687, %v40
    %v689 = vpop.permute.xlu0 %688
    %691 = vset.pattern.permute.xlu0 6
    %692 = vperm.xlu0 %691, %v41
    %v693 = vpop.permute.xlu0 %692
    %695 = vset.pattern.permute.xlu0 6
    %696 = vperm.xlu0 %695, %v42
    %v697 = vpop.permute.xlu0 %696
    %699 = vset.pattern.permute.xlu0 6
    %700 = vperm.xlu0 %699, %v43
    %v701 = vpop.permute.xlu0 %700
    %v703 = vlaneseq
    %v704 = vshrl.u32 %v703, 7
    %v705 = vsub.s32 6, %v704
    %v706 = vrot.slane %v491, %v705
    %v707 = vlaneseq
    %v708 = vshrl.u32 %v707, 7
    %v709 = vsub.s32 6, %v708
    %v710 = vrot.slane %v493, %v709
    %v711 = vmul.f32 %v689, %v706
    %v712 = vmul.f32 %v693, %v706
    %v713 = vmul.f32 %v697, %v710
    %v714 = vmul.f32 %v701, %v710
    %v715 = vadd.f32 %v683, %v711
    %v716 = vadd.f32 %v684, %v712
    %v717 = vadd.f32 %v685, %v713
    %v718 = vadd.f32 %v686, %v714
    %719 = vset.pattern.permute.xlu0 7
    %720 = vperm.xlu0 %719, %v40
    %v721 = vpop.permute.xlu0 %720
    %723 = vset.pattern.permute.xlu0 7
    %724 = vperm.xlu0 %723, %v41
    %v725 = vpop.permute.xlu0 %724
    %727 = vset.pattern.permute.xlu0 7
    %728 = vperm.xlu0 %727, %v42
    %v729 = vpop.permute.xlu0 %728
    %731 = vset.pattern.permute.xlu0 7
    %732 = vperm.xlu0 %731, %v43
    %v733 = vpop.permute.xlu0 %732
    %v735 = vlaneseq
    %v736 = vshrl.u32 %v735, 7
    %v737 = vsub.s32 7, %v736
    %v738 = vrot.slane %v491, %v737
    %v739 = vlaneseq
    %v740 = vshrl.u32 %v739, 7
    %v741 = vsub.s32 7, %v740
    %v742 = vrot.slane %v493, %v741
    %v743 = vmul.f32 %v721, %v738
    %v744 = vmul.f32 %v725, %v738
    %v745 = vmul.f32 %v729, %v742
    %v746 = vmul.f32 %v733, %v742
    %v747 = vadd.f32 %v715, %v743
    %v748 = vadd.f32 %v716, %v744
    %v749 = vadd.f32 %v717, %v745
    %v750 = vadd.f32 %v718, %v746
    %751 = vset.pattern.permute.xlu0 8
    %752 = vperm.xlu0 %751, %v40
    %v753 = vpop.permute.xlu0 %752
    %755 = vset.pattern.permute.xlu0 8
    %756 = vperm.xlu0 %755, %v41
    %v757 = vpop.permute.xlu0 %756
    %759 = vset.pattern.permute.xlu0 8
    %760 = vperm.xlu0 %759, %v42
    %v761 = vpop.permute.xlu0 %760
    %763 = vset.pattern.permute.xlu0 8
    %764 = vperm.xlu0 %763, %v43
    %v765 = vpop.permute.xlu0 %764
    %v767 = vlaneseq
    %v768 = vshrl.u32 %v767, 7
    %v769 = vsub.s32 0, %v768
    %v770 = vrot.slane %v492, %v769
    %v771 = vlaneseq
    %v772 = vshrl.u32 %v771, 7
    %v773 = vsub.s32 0, %v772
    %v774 = vrot.slane %v494, %v773
    %v775 = vmul.f32 %v753, %v770
    %v776 = vmul.f32 %v757, %v770
    %v777 = vmul.f32 %v761, %v774
    %v778 = vmul.f32 %v765, %v774
    %v779 = vadd.f32 %v747, %v775
    %v780 = vadd.f32 %v748, %v776
    %v781 = vadd.f32 %v749, %v777
    %v782 = vadd.f32 %v750, %v778
    %783 = vset.pattern.permute.xlu0 9
    %784 = vperm.xlu0 %783, %v40
    %v785 = vpop.permute.xlu0 %784
    %787 = vset.pattern.permute.xlu0 9
    %788 = vperm.xlu0 %787, %v41
    %v789 = vpop.permute.xlu0 %788
    %791 = vset.pattern.permute.xlu0 9
    %792 = vperm.xlu0 %791, %v42
    %v793 = vpop.permute.xlu0 %792
    %795 = vset.pattern.permute.xlu0 9
    %796 = vperm.xlu0 %795, %v43
    %v797 = vpop.permute.xlu0 %796
    %v799 = vlaneseq
    %v800 = vshrl.u32 %v799, 7
    %v801 = vsub.s32 1, %v800
    %v802 = vrot.slane %v492, %v801
    %v803 = vlaneseq
    %v804 = vshrl.u32 %v803, 7
    %v805 = vsub.s32 1, %v804
    %v806 = vrot.slane %v494, %v805
    %v807 = vmul.f32 %v785, %v802
    %v808 = vmul.f32 %v789, %v802
    %v809 = vmul.f32 %v793, %v806
    %v810 = vmul.f32 %v797, %v806
    %v811 = vadd.f32 %v779, %v807
    %v812 = vadd.f32 %v780, %v808
    %v813 = vadd.f32 %v781, %v809
    %v814 = vadd.f32 %v782, %v810
    %v817 = vrot.slane %v811, 1
    %vm818 = vcmask 1041409
    %v819 = vsel %vm818, %v813, %v817
    %vm820 = vcmask 64512
    %v821 = vsel %vm820, %v819, 0
    %823 = vmatprep.subr.mxu0 0.0
    %824 = vmatpush1.msra.mxu0 0.0
    %825 = vmatprep.subr.mxu0 0.0
    %826 = vmatpush1.msra.mxu0 0.0
    %827 = vmatprep.subr.mxu0 0.0
    %828 = vmatpush1.msra.mxu0 0.0
    %829 = vmatprep.subr.mxu0 0.0
    %830 = vmatpush1.msra.mxu0 0.0
    %831 = vmatprep.subr.mxu0 0.0
    %832 = vmatpush1.msra.mxu0 0.0
    %833 = vmatprep.subr.mxu0 0.0
    %834 = vmatpush1.msra.mxu0 0.0
    %835 = vmatprep.subr.mxu0 0.0
    %836 = vmatpush1.msra.mxu0 0.0
    %837 = vmatprep.subr.mxu0 0.0
    %838 = vmatpush1.msra.mxu0 0.0
    %839 = vmatprep.subr.mxu0 0.0
    %840 = vmatpush1.msra.mxu0 0.0
    %841 = vmatprep.subr.mxu0 0.0
    %842 = vmatpush1.msra.mxu0 0.0
    %843 = vmatprep.subr.mxu0 0.0
    %844 = vmatpush1.msra.mxu0 0.0
    %845 = vmatprep.subr.mxu0 0.0
    %846 = vmatpush1.msra.mxu0 0.0
    %847 = vmatprep.subr.mxu0 0.0
    %848 = vmatpush1.msra.mxu0 0.0
    %849 = vmatprep.subr.mxu0 0.0
    %850 = vmatpush1.msra.mxu0 0.0
    %851 = vmatprep.subr.mxu0 0.0
    %852 = vmatpush1.msra.mxu0 0.0
    %853 = vmatprep.subr.mxu0 0.0
    %854 = vmatpush1.msra.mxu0 %v55
    %855 = vmatprep.subr.mxu0 0.0
    %856 = vmatpush2.msra.mxu0 0.0
    %857 = vmatprep.subr.mxu0 0.0
    %858 = vmatpush2.msra.mxu0 0.0
    %859 = vmatprep.subr.mxu0 0.0
    %860 = vmatpush2.msra.mxu0 0.0
    %861 = vmatprep.subr.mxu0 0.0
    %862 = vmatpush2.msra.mxu0 0.0
    %863 = vmatprep.subr.mxu0 0.0
    %864 = vmatpush2.msra.mxu0 0.0
    %865 = vmatprep.subr.mxu0 0.0
    %866 = vmatpush2.msra.mxu0 0.0
    %867 = vmatprep.subr.mxu0 0.0
    %868 = vmatpush2.msra.mxu0 0.0
    %869 = vmatprep.subr.mxu0 0.0
    %870 = vmatpush2.msra.mxu0 0.0
    %871 = vmatprep.subr.mxu0 0.0
    %872 = vmatpush2.msra.mxu0 0.0
    %873 = vmatprep.subr.mxu0 0.0
    %874 = vmatpush2.msra.mxu0 0.0
    %875 = vmatprep.subr.mxu0 0.0
    %876 = vmatpush2.msra.mxu0 0.0
    %877 = vmatprep.subr.mxu0 0.0
    %878 = vmatpush2.msra.mxu0 0.0
    %879 = vmatprep.subr.mxu0 0.0
    %880 = vmatpush2.msra.mxu0 0.0
    %881 = vmatprep.subr.mxu0 0.0
    %882 = vmatpush2.msra.mxu0 0.0
    %883 = vmatprep.subr.mxu0 0.0
    %884 = vmatpush2.msra.mxu0 0.0
    %885 = vmatprep.subr.mxu0 0.0
    %886 = vmatpush2.msra.mxu0 0.0
    %887 = vmatprep.mubr.f32.mxu0 0.0
    %888 = vmatmul.mubr.f32.gmra.mxu0 %v821
    %v889 = vpop.f32.mrf.mxu0
    %v890 = vadd.f32 0.0, %v889
    %v891 = vpop.f32.mrf.mxu0
    %892 = vdwg.mxu0
    %v893 = vrot.slane %v811, 3
    %v894 = vrot.slane %v813, 2
    %v895 = vsel %vm818, %v894, %v893
    %v896 = vsel %vm820, %v895, 0
    %898 = vmatprep.subr.mxu0 0.0
    %899 = vmatpush1.msra.mxu0 0.0
    %900 = vmatprep.subr.mxu0 0.0
    %901 = vmatpush1.msra.mxu0 0.0
    %902 = vmatprep.subr.mxu0 0.0
    %903 = vmatpush1.msra.mxu0 0.0
    %904 = vmatprep.subr.mxu0 0.0
    %905 = vmatpush1.msra.mxu0 0.0
    %906 = vmatprep.subr.mxu0 0.0
    %907 = vmatpush1.msra.mxu0 0.0
    %908 = vmatprep.subr.mxu0 0.0
    %909 = vmatpush1.msra.mxu0 0.0
    %910 = vmatprep.subr.mxu0 0.0
    %911 = vmatpush1.msra.mxu0 0.0
    %912 = vmatprep.subr.mxu0 0.0
    %913 = vmatpush1.msra.mxu0 0.0
    %914 = vmatprep.subr.mxu0 0.0
    %915 = vmatpush1.msra.mxu0 0.0
    %916 = vmatprep.subr.mxu0 0.0
    %917 = vmatpush1.msra.mxu0 0.0
    %918 = vmatprep.subr.mxu0 0.0
    %919 = vmatpush1.msra.mxu0 0.0
    %920 = vmatprep.subr.mxu0 0.0
    %921 = vmatpush1.msra.mxu0 0.0
    %922 = vmatprep.subr.mxu0 0.0
    %923 = vmatpush1.msra.mxu0 0.0
    %924 = vmatprep.subr.mxu0 0.0
    %925 = vmatpush1.msra.mxu0 0.0
    %926 = vmatprep.subr.mxu0 0.0
    %927 = vmatpush1.msra.mxu0 0.0
    %928 = vmatprep.subr.mxu0 0.0
    %929 = vmatpush1.msra.mxu0 %v57
    %930 = vmatprep.subr.mxu0 0.0
    %931 = vmatpush2.msra.mxu0 0.0
    %932 = vmatprep.subr.mxu0 0.0
    %933 = vmatpush2.msra.mxu0 0.0
    %934 = vmatprep.subr.mxu0 0.0
    %935 = vmatpush2.msra.mxu0 0.0
    %936 = vmatprep.subr.mxu0 0.0
    %937 = vmatpush2.msra.mxu0 0.0
    %938 = vmatprep.subr.mxu0 0.0
    %939 = vmatpush2.msra.mxu0 0.0
    %940 = vmatprep.subr.mxu0 0.0
    %941 = vmatpush2.msra.mxu0 0.0
    %942 = vmatprep.subr.mxu0 0.0
    %943 = vmatpush2.msra.mxu0 0.0
    %944 = vmatprep.subr.mxu0 0.0
    %945 = vmatpush2.msra.mxu0 0.0
    %946 = vmatprep.subr.mxu0 0.0
    %947 = vmatpush2.msra.mxu0 0.0
    %948 = vmatprep.subr.mxu0 0.0
    %949 = vmatpush2.msra.mxu0 0.0
    %950 = vmatprep.subr.mxu0 0.0
    %951 = vmatpush2.msra.mxu0 0.0
    %952 = vmatprep.subr.mxu0 0.0
    %953 = vmatpush2.msra.mxu0 0.0
    %954 = vmatprep.subr.mxu0 0.0
    %955 = vmatpush2.msra.mxu0 0.0
    %956 = vmatprep.subr.mxu0 0.0
    %957 = vmatpush2.msra.mxu0 0.0
    %958 = vmatprep.subr.mxu0 0.0
    %959 = vmatpush2.msra.mxu0 0.0
    %960 = vmatprep.subr.mxu0 0.0
    %961 = vmatpush2.msra.mxu0 0.0
    %962 = vmatprep.mubr.f32.mxu0 0.0
    %963 = vmatmul.mubr.f32.gmra.mxu0 %v896
    %v964 = vpop.f32.mrf.mxu0
    %v965 = vadd.f32 0.0, %v964
    %v966 = vpop.f32.mrf.mxu0
    %967 = vdwg.mxu0
    %v968 = vrot.slane %v811, 5
    %v969 = vrot.slane %v813, 4
    %v970 = vsel %vm818, %v969, %v968
    %v971 = vsel %vm820, %v970, 0
    %973 = vmatprep.subr.mxu0 0.0
    %974 = vmatpush1.msra.mxu0 0.0
    %975 = vmatprep.subr.mxu0 0.0
    %976 = vmatpush1.msra.mxu0 0.0
    %977 = vmatprep.subr.mxu0 0.0
    %978 = vmatpush1.msra.mxu0 0.0
    %979 = vmatprep.subr.mxu0 0.0
    %980 = vmatpush1.msra.mxu0 0.0
    %981 = vmatprep.subr.mxu0 0.0
    %982 = vmatpush1.msra.mxu0 0.0
    %983 = vmatprep.subr.mxu0 0.0
    %984 = vmatpush1.msra.mxu0 0.0
    %985 = vmatprep.subr.mxu0 0.0
    %986 = vmatpush1.msra.mxu0 0.0
    %987 = vmatprep.subr.mxu0 0.0
    %988 = vmatpush1.msra.mxu0 0.0
    %989 = vmatprep.subr.mxu0 0.0
    %990 = vmatpush1.msra.mxu0 0.0
    %991 = vmatprep.subr.mxu0 0.0
    %992 = vmatpush1.msra.mxu0 0.0
    %993 = vmatprep.subr.mxu0 0.0
    %994 = vmatpush1.msra.mxu0 0.0
    %995 = vmatprep.subr.mxu0 0.0
    %996 = vmatpush1.msra.mxu0 0.0
    %997 = vmatprep.subr.mxu0 0.0
    %998 = vmatpush1.msra.mxu0 0.0
    %999 = vmatprep.subr.mxu0 0.0
    %1000 = vmatpush1.msra.mxu0 0.0
    %1001 = vmatprep.subr.mxu0 0.0
    %1002 = vmatpush1.msra.mxu0 0.0
    %1003 = vmatprep.subr.mxu0 0.0
    %1004 = vmatpush1.msra.mxu0 %v59
    %1005 = vmatprep.subr.mxu0 0.0
    %1006 = vmatpush2.msra.mxu0 0.0
    %1007 = vmatprep.subr.mxu0 0.0
    %1008 = vmatpush2.msra.mxu0 0.0
    %1009 = vmatprep.subr.mxu0 0.0
    %1010 = vmatpush2.msra.mxu0 0.0
    %1011 = vmatprep.subr.mxu0 0.0
    %1012 = vmatpush2.msra.mxu0 0.0
    %1013 = vmatprep.subr.mxu0 0.0
    %1014 = vmatpush2.msra.mxu0 0.0
    %1015 = vmatprep.subr.mxu0 0.0
    %1016 = vmatpush2.msra.mxu0 0.0
    %1017 = vmatprep.subr.mxu0 0.0
    %1018 = vmatpush2.msra.mxu0 0.0
    %1019 = vmatprep.subr.mxu0 0.0
    %1020 = vmatpush2.msra.mxu0 0.0
    %1021 = vmatprep.subr.mxu0 0.0
    %1022 = vmatpush2.msra.mxu0 0.0
    %1023 = vmatprep.subr.mxu0 0.0
    %1024 = vmatpush2.msra.mxu0 0.0
    %1025 = vmatprep.subr.mxu0 0.0
    %1026 = vmatpush2.msra.mxu0 0.0
    %1027 = vmatprep.subr.mxu0 0.0
    %1028 = vmatpush2.msra.mxu0 0.0
    %1029 = vmatprep.subr.mxu0 0.0
    %1030 = vmatpush2.msra.mxu0 0.0
    %1031 = vmatprep.subr.mxu0 0.0
    %1032 = vmatpush2.msra.mxu0 0.0
    %1033 = vmatprep.subr.mxu0 0.0
    %1034 = vmatpush2.msra.mxu0 0.0
    %1035 = vmatprep.subr.mxu0 0.0
    %1036 = vmatpush2.msra.mxu0 0.0
    %1037 = vmatprep.mubr.f32.mxu0 0.0
    %1038 = vmatmul.mubr.f32.gmra.mxu0 %v971
    %v1039 = vpop.f32.mrf.mxu0
    %v1040 = vadd.f32 0.0, %v1039
    %v1041 = vpop.f32.mrf.mxu0
    %1042 = vdwg.mxu0
    %v1043 = vrot.slane %v811, 7
    %v1044 = vrot.slane %v813, 6
    %v1045 = vsel %vm818, %v1044, %v1043
    %v1046 = vsel %vm820, %v1045, 0
    %1048 = vmatprep.subr.mxu0 0.0
    %1049 = vmatpush1.msra.mxu0 0.0
    %1050 = vmatprep.subr.mxu0 0.0
    %1051 = vmatpush1.msra.mxu0 0.0
    %1052 = vmatprep.subr.mxu0 0.0
    %1053 = vmatpush1.msra.mxu0 0.0
    %1054 = vmatprep.subr.mxu0 0.0
    %1055 = vmatpush1.msra.mxu0 0.0
    %1056 = vmatprep.subr.mxu0 0.0
    %1057 = vmatpush1.msra.mxu0 0.0
    %1058 = vmatprep.subr.mxu0 0.0
    %1059 = vmatpush1.msra.mxu0 0.0
    %1060 = vmatprep.subr.mxu0 0.0
    %1061 = vmatpush1.msra.mxu0 0.0
    %1062 = vmatprep.subr.mxu0 0.0
    %1063 = vmatpush1.msra.mxu0 0.0
    %1064 = vmatprep.subr.mxu0 0.0
    %1065 = vmatpush1.msra.mxu0 0.0
    %1066 = vmatprep.subr.mxu0 0.0
    %1067 = vmatpush1.msra.mxu0 0.0
    %1068 = vmatprep.subr.mxu0 0.0
    %1069 = vmatpush1.msra.mxu0 0.0
    %1070 = vmatprep.subr.mxu0 0.0
    %1071 = vmatpush1.msra.mxu0 0.0
    %1072 = vmatprep.subr.mxu0 0.0
    %1073 = vmatpush1.msra.mxu0 0.0
    %1074 = vmatprep.subr.mxu0 0.0
    %1075 = vmatpush1.msra.mxu0 0.0
    %1076 = vmatprep.subr.mxu0 0.0
    %1077 = vmatpush1.msra.mxu0 0.0
    %1078 = vmatprep.subr.mxu0 0.0
    %1079 = vmatpush1.msra.mxu0 %v61
    %1080 = vmatprep.subr.mxu0 0.0
    %1081 = vmatpush2.msra.mxu0 0.0
    %1082 = vmatprep.subr.mxu0 0.0
    %1083 = vmatpush2.msra.mxu0 0.0
    %1084 = vmatprep.subr.mxu0 0.0
    %1085 = vmatpush2.msra.mxu0 0.0
    %1086 = vmatprep.subr.mxu0 0.0
    %1087 = vmatpush2.msra.mxu0 0.0
    %1088 = vmatprep.subr.mxu0 0.0
    %1089 = vmatpush2.msra.mxu0 0.0
    %1090 = vmatprep.subr.mxu0 0.0
    %1091 = vmatpush2.msra.mxu0 0.0
    %1092 = vmatprep.subr.mxu0 0.0
    %1093 = vmatpush2.msra.mxu0 0.0
    %1094 = vmatprep.subr.mxu0 0.0
    %1095 = vmatpush2.msra.mxu0 0.0
    %1096 = vmatprep.subr.mxu0 0.0
    %1097 = vmatpush2.msra.mxu0 0.0
    %1098 = vmatprep.subr.mxu0 0.0
    %1099 = vmatpush2.msra.mxu0 0.0
    %1100 = vmatprep.subr.mxu0 0.0
    %1101 = vmatpush2.msra.mxu0 0.0
    %1102 = vmatprep.subr.mxu0 0.0
    %1103 = vmatpush2.msra.mxu0 0.0
    %1104 = vmatprep.subr.mxu0 0.0
    %1105 = vmatpush2.msra.mxu0 0.0
    %1106 = vmatprep.subr.mxu0 0.0
    %1107 = vmatpush2.msra.mxu0 0.0
    %1108 = vmatprep.subr.mxu0 0.0
    %1109 = vmatpush2.msra.mxu0 0.0
    %1110 = vmatprep.subr.mxu0 0.0
    %1111 = vmatpush2.msra.mxu0 0.0
    %1112 = vmatprep.mubr.f32.mxu0 0.0
    %1113 = vmatmul.mubr.f32.gmra.mxu0 %v1046
    %v1114 = vpop.f32.mrf.mxu0
    %v1115 = vadd.f32 0.0, %v1114
    %v1116 = vpop.f32.mrf.mxu0
    %1117 = vdwg.mxu0
    %v1120 = vrot.slane %v812, 1
    %v1121 = vsel %vm818, %v814, %v1120
    %v1122 = vsel %vm820, %v1121, 0
    %1124 = vmatprep.subr.mxu0 0.0
    %1125 = vmatpush1.msra.mxu0 0.0
    %1126 = vmatprep.subr.mxu0 0.0
    %1127 = vmatpush1.msra.mxu0 0.0
    %1128 = vmatprep.subr.mxu0 0.0
    %1129 = vmatpush1.msra.mxu0 0.0
    %1130 = vmatprep.subr.mxu0 0.0
    %1131 = vmatpush1.msra.mxu0 0.0
    %1132 = vmatprep.subr.mxu0 0.0
    %1133 = vmatpush1.msra.mxu0 0.0
    %1134 = vmatprep.subr.mxu0 0.0
    %1135 = vmatpush1.msra.mxu0 0.0
    %1136 = vmatprep.subr.mxu0 0.0
    %1137 = vmatpush1.msra.mxu0 0.0
    %1138 = vmatprep.subr.mxu0 0.0
    %1139 = vmatpush1.msra.mxu0 0.0
    %1140 = vmatprep.subr.mxu0 0.0
    %1141 = vmatpush1.msra.mxu0 0.0
    %1142 = vmatprep.subr.mxu0 0.0
    %1143 = vmatpush1.msra.mxu0 0.0
    %1144 = vmatprep.subr.mxu0 0.0
    %1145 = vmatpush1.msra.mxu0 0.0
    %1146 = vmatprep.subr.mxu0 0.0
    %1147 = vmatpush1.msra.mxu0 0.0
    %1148 = vmatprep.subr.mxu0 0.0
    %1149 = vmatpush1.msra.mxu0 0.0
    %1150 = vmatprep.subr.mxu0 0.0
    %1151 = vmatpush1.msra.mxu0 0.0
    %1152 = vmatprep.subr.mxu0 0.0
    %1153 = vmatpush1.msra.mxu0 0.0
    %1154 = vmatprep.subr.mxu0 0.0
    %1155 = vmatpush1.msra.mxu0 %v63
    %1156 = vmatprep.subr.mxu0 0.0
    %1157 = vmatpush2.msra.mxu0 0.0
    %1158 = vmatprep.subr.mxu0 0.0
    %1159 = vmatpush2.msra.mxu0 0.0
    %1160 = vmatprep.subr.mxu0 0.0
    %1161 = vmatpush2.msra.mxu0 0.0
    %1162 = vmatprep.subr.mxu0 0.0
    %1163 = vmatpush2.msra.mxu0 0.0
    %1164 = vmatprep.subr.mxu0 0.0
    %1165 = vmatpush2.msra.mxu0 0.0
    %1166 = vmatprep.subr.mxu0 0.0
    %1167 = vmatpush2.msra.mxu0 0.0
    %1168 = vmatprep.subr.mxu0 0.0
    %1169 = vmatpush2.msra.mxu0 0.0
    %1170 = vmatprep.subr.mxu0 0.0
    %1171 = vmatpush2.msra.mxu0 0.0
    %1172 = vmatprep.subr.mxu0 0.0
    %1173 = vmatpush2.msra.mxu0 0.0
    %1174 = vmatprep.subr.mxu0 0.0
    %1175 = vmatpush2.msra.mxu0 0.0
    %1176 = vmatprep.subr.mxu0 0.0
    %1177 = vmatpush2.msra.mxu0 0.0
    %1178 = vmatprep.subr.mxu0 0.0
    %1179 = vmatpush2.msra.mxu0 0.0
    %1180 = vmatprep.subr.mxu0 0.0
    %1181 = vmatpush2.msra.mxu0 0.0
    %1182 = vmatprep.subr.mxu0 0.0
    %1183 = vmatpush2.msra.mxu0 0.0
    %1184 = vmatprep.subr.mxu0 0.0
    %1185 = vmatpush2.msra.mxu0 0.0
    %1186 = vmatprep.subr.mxu0 0.0
    %1187 = vmatpush2.msra.mxu0 0.0
    %1188 = vmatprep.mubr.f32.mxu0 0.0
    %1189 = vmatmul.mubr.f32.gmra.mxu0 %v1122
    %v1190 = vpop.f32.mrf.mxu0
    %v1191 = vadd.f32 0.0, %v1190
    %v1192 = vpop.f32.mrf.mxu0
    %1193 = vdwg.mxu0
    %v1194 = vrot.slane %v813, 7
    %v1195 = vsel %vm818, %v1194, %v811
    %v1196 = vsel %vm820, %v1195, 0
    %1198 = vmatprep.subr.mxu0 0.0
    %1199 = vmatpush1.msra.mxu0 0.0
    %1200 = vmatprep.subr.mxu0 0.0
    %1201 = vmatpush1.msra.mxu0 0.0
    %1202 = vmatprep.subr.mxu0 0.0
    %1203 = vmatpush1.msra.mxu0 0.0
    %1204 = vmatprep.subr.mxu0 0.0
    %1205 = vmatpush1.msra.mxu0 0.0
    %1206 = vmatprep.subr.mxu0 0.0
    %1207 = vmatpush1.msra.mxu0 0.0
    %1208 = vmatprep.subr.mxu0 0.0
    %1209 = vmatpush1.msra.mxu0 0.0
    %1210 = vmatprep.subr.mxu0 0.0
    %1211 = vmatpush1.msra.mxu0 0.0
    %1212 = vmatprep.subr.mxu0 0.0
    %1213 = vmatpush1.msra.mxu0 0.0
    %1214 = vmatprep.subr.mxu0 0.0
    %1215 = vmatpush1.msra.mxu0 0.0
    %1216 = vmatprep.subr.mxu0 0.0
    %1217 = vmatpush1.msra.mxu0 0.0
    %1218 = vmatprep.subr.mxu0 0.0
    %1219 = vmatpush1.msra.mxu0 0.0
    %1220 = vmatprep.subr.mxu0 0.0
    %1221 = vmatpush1.msra.mxu0 0.0
    %1222 = vmatprep.subr.mxu0 0.0
    %1223 = vmatpush1.msra.mxu0 0.0
    %1224 = vmatprep.subr.mxu0 0.0
    %1225 = vmatpush1.msra.mxu0 0.0
    %1226 = vmatprep.subr.mxu0 0.0
    %1227 = vmatpush1.msra.mxu0 0.0
    %1228 = vmatprep.subr.mxu0 0.0
    %1229 = vmatpush1.msra.mxu0 %v54
    %1230 = vmatprep.subr.mxu0 0.0
    %1231 = vmatpush2.msra.mxu0 0.0
    %1232 = vmatprep.subr.mxu0 0.0
    %1233 = vmatpush2.msra.mxu0 0.0
    %1234 = vmatprep.subr.mxu0 0.0
    %1235 = vmatpush2.msra.mxu0 0.0
    %1236 = vmatprep.subr.mxu0 0.0
    %1237 = vmatpush2.msra.mxu0 0.0
    %1238 = vmatprep.subr.mxu0 0.0
    %1239 = vmatpush2.msra.mxu0 0.0
    %1240 = vmatprep.subr.mxu0 0.0
    %1241 = vmatpush2.msra.mxu0 0.0
    %1242 = vmatprep.subr.mxu0 0.0
    %1243 = vmatpush2.msra.mxu0 0.0
    %1244 = vmatprep.subr.mxu0 0.0
    %1245 = vmatpush2.msra.mxu0 0.0
    %1246 = vmatprep.subr.mxu0 0.0
    %1247 = vmatpush2.msra.mxu0 0.0
    %1248 = vmatprep.subr.mxu0 0.0
    %1249 = vmatpush2.msra.mxu0 0.0
    %1250 = vmatprep.subr.mxu0 0.0
    %1251 = vmatpush2.msra.mxu0 0.0
    %1252 = vmatprep.subr.mxu0 0.0
    %1253 = vmatpush2.msra.mxu0 0.0
    %1254 = vmatprep.subr.mxu0 0.0
    %1255 = vmatpush2.msra.mxu0 0.0
    %1256 = vmatprep.subr.mxu0 0.0
    %1257 = vmatpush2.msra.mxu0 0.0
    %1258 = vmatprep.subr.mxu0 0.0
    %1259 = vmatpush2.msra.mxu0 0.0
    %1260 = vmatprep.subr.mxu0 0.0
    %1261 = vmatpush2.msra.mxu0 0.0
    %1262 = vmatprep.mubr.f32.mxu0 0.0
    %1263 = vmatmul.mubr.f32.gmra.mxu0 %v1196
    %v1264 = vpop.f32.mrf.mxu0
    %v1265 = vadd.f32 %v890, %v1264
    %v1266 = vpop.f32.mrf.mxu0
    %1267 = vdwg.mxu0
    %v1268 = vrot.slane %v811, 2
    %v1269 = vrot.slane %v813, 1
    %v1270 = vsel %vm818, %v1269, %v1268
    %v1271 = vsel %vm820, %v1270, 0
    %1273 = vmatprep.subr.mxu0 0.0
    %1274 = vmatpush1.msra.mxu0 0.0
    %1275 = vmatprep.subr.mxu0 0.0
    %1276 = vmatpush1.msra.mxu0 0.0
    %1277 = vmatprep.subr.mxu0 0.0
    %1278 = vmatpush1.msra.mxu0 0.0
    %1279 = vmatprep.subr.mxu0 0.0
    %1280 = vmatpush1.msra.mxu0 0.0
    %1281 = vmatprep.subr.mxu0 0.0
    %1282 = vmatpush1.msra.mxu0 0.0
    %1283 = vmatprep.subr.mxu0 0.0
    %1284 = vmatpush1.msra.mxu0 0.0
    %1285 = vmatprep.subr.mxu0 0.0
    %1286 = vmatpush1.msra.mxu0 0.0
    %1287 = vmatprep.subr.mxu0 0.0
    %1288 = vmatpush1.msra.mxu0 0.0
    %1289 = vmatprep.subr.mxu0 0.0
    %1290 = vmatpush1.msra.mxu0 0.0
    %1291 = vmatprep.subr.mxu0 0.0
    %1292 = vmatpush1.msra.mxu0 0.0
    %1293 = vmatprep.subr.mxu0 0.0
    %1294 = vmatpush1.msra.mxu0 0.0
    %1295 = vmatprep.subr.mxu0 0.0
    %1296 = vmatpush1.msra.mxu0 0.0
    %1297 = vmatprep.subr.mxu0 0.0
    %1298 = vmatpush1.msra.mxu0 0.0
    %1299 = vmatprep.subr.mxu0 0.0
    %1300 = vmatpush1.msra.mxu0 0.0
    %1301 = vmatprep.subr.mxu0 0.0
    %1302 = vmatpush1.msra.mxu0 0.0
    %1303 = vmatprep.subr.mxu0 0.0
    %1304 = vmatpush1.msra.mxu0 %v56
    %1305 = vmatprep.subr.mxu0 0.0
    %1306 = vmatpush2.msra.mxu0 0.0
    %1307 = vmatprep.subr.mxu0 0.0
    %1308 = vmatpush2.msra.mxu0 0.0
    %1309 = vmatprep.subr.mxu0 0.0
    %1310 = vmatpush2.msra.mxu0 0.0
    %1311 = vmatprep.subr.mxu0 0.0
    %1312 = vmatpush2.msra.mxu0 0.0
    %1313 = vmatprep.subr.mxu0 0.0
    %1314 = vmatpush2.msra.mxu0 0.0
    %1315 = vmatprep.subr.mxu0 0.0
    %1316 = vmatpush2.msra.mxu0 0.0
    %1317 = vmatprep.subr.mxu0 0.0
    %1318 = vmatpush2.msra.mxu0 0.0
    %1319 = vmatprep.subr.mxu0 0.0
    %1320 = vmatpush2.msra.mxu0 0.0
    %1321 = vmatprep.subr.mxu0 0.0
    %1322 = vmatpush2.msra.mxu0 0.0
    %1323 = vmatprep.subr.mxu0 0.0
    %1324 = vmatpush2.msra.mxu0 0.0
    %1325 = vmatprep.subr.mxu0 0.0
    %1326 = vmatpush2.msra.mxu0 0.0
    %1327 = vmatprep.subr.mxu0 0.0
    %1328 = vmatpush2.msra.mxu0 0.0
    %1329 = vmatprep.subr.mxu0 0.0
    %1330 = vmatpush2.msra.mxu0 0.0
    %1331 = vmatprep.subr.mxu0 0.0
    %1332 = vmatpush2.msra.mxu0 0.0
    %1333 = vmatprep.subr.mxu0 0.0
    %1334 = vmatpush2.msra.mxu0 0.0
    %1335 = vmatprep.subr.mxu0 0.0
    %1336 = vmatpush2.msra.mxu0 0.0
    %1337 = vmatprep.mubr.f32.mxu0 0.0
    %1338 = vmatmul.mubr.f32.gmra.mxu0 %v1271
    %v1339 = vpop.f32.mrf.mxu0
    %v1340 = vadd.f32 %v965, %v1339
    %v1341 = vpop.f32.mrf.mxu0
    %1342 = vdwg.mxu0
    %v1343 = vrot.slane %v811, 4
    %v1344 = vrot.slane %v813, 3
    %v1345 = vsel %vm818, %v1344, %v1343
    %v1346 = vsel %vm820, %v1345, 0
    %1348 = vmatprep.subr.mxu0 0.0
    %1349 = vmatpush1.msra.mxu0 0.0
    %1350 = vmatprep.subr.mxu0 0.0
    %1351 = vmatpush1.msra.mxu0 0.0
    %1352 = vmatprep.subr.mxu0 0.0
    %1353 = vmatpush1.msra.mxu0 0.0
    %1354 = vmatprep.subr.mxu0 0.0
    %1355 = vmatpush1.msra.mxu0 0.0
    %1356 = vmatprep.subr.mxu0 0.0
    %1357 = vmatpush1.msra.mxu0 0.0
    %1358 = vmatprep.subr.mxu0 0.0
    %1359 = vmatpush1.msra.mxu0 0.0
    %1360 = vmatprep.subr.mxu0 0.0
    %1361 = vmatpush1.msra.mxu0 0.0
    %1362 = vmatprep.subr.mxu0 0.0
    %1363 = vmatpush1.msra.mxu0 0.0
    %1364 = vmatprep.subr.mxu0 0.0
    %1365 = vmatpush1.msra.mxu0 0.0
    %1366 = vmatprep.subr.mxu0 0.0
    %1367 = vmatpush1.msra.mxu0 0.0
    %1368 = vmatprep.subr.mxu0 0.0
    %1369 = vmatpush1.msra.mxu0 0.0
    %1370 = vmatprep.subr.mxu0 0.0
    %1371 = vmatpush1.msra.mxu0 0.0
    %1372 = vmatprep.subr.mxu0 0.0
    %1373 = vmatpush1.msra.mxu0 0.0
    %1374 = vmatprep.subr.mxu0 0.0
    %1375 = vmatpush1.msra.mxu0 0.0
    %1376 = vmatprep.subr.mxu0 0.0
    %1377 = vmatpush1.msra.mxu0 0.0
    %1378 = vmatprep.subr.mxu0 0.0
    %1379 = vmatpush1.msra.mxu0 %v58
    %1380 = vmatprep.subr.mxu0 0.0
    %1381 = vmatpush2.msra.mxu0 0.0
    %1382 = vmatprep.subr.mxu0 0.0
    %1383 = vmatpush2.msra.mxu0 0.0
    %1384 = vmatprep.subr.mxu0 0.0
    %1385 = vmatpush2.msra.mxu0 0.0
    %1386 = vmatprep.subr.mxu0 0.0
    %1387 = vmatpush2.msra.mxu0 0.0
    %1388 = vmatprep.subr.mxu0 0.0
    %1389 = vmatpush2.msra.mxu0 0.0
    %1390 = vmatprep.subr.mxu0 0.0
    %1391 = vmatpush2.msra.mxu0 0.0
    %1392 = vmatprep.subr.mxu0 0.0
    %1393 = vmatpush2.msra.mxu0 0.0
    %1394 = vmatprep.subr.mxu0 0.0
    %1395 = vmatpush2.msra.mxu0 0.0
    %1396 = vmatprep.subr.mxu0 0.0
    %1397 = vmatpush2.msra.mxu0 0.0
    %1398 = vmatprep.subr.mxu0 0.0
    %1399 = vmatpush2.msra.mxu0 0.0
    %1400 = vmatprep.subr.mxu0 0.0
    %1401 = vmatpush2.msra.mxu0 0.0
    %1402 = vmatprep.subr.mxu0 0.0
    %1403 = vmatpush2.msra.mxu0 0.0
    %1404 = vmatprep.subr.mxu0 0.0
    %1405 = vmatpush2.msra.mxu0 0.0
    %1406 = vmatprep.subr.mxu0 0.0
    %1407 = vmatpush2.msra.mxu0 0.0
    %1408 = vmatprep.subr.mxu0 0.0
    %1409 = vmatpush2.msra.mxu0 0.0
    %1410 = vmatprep.subr.mxu0 0.0
    %1411 = vmatpush2.msra.mxu0 0.0
    %1412 = vmatprep.mubr.f32.mxu0 0.0
    %1413 = vmatmul.mubr.f32.gmra.mxu0 %v1346
    %v1414 = vpop.f32.mrf.mxu0
    %v1415 = vadd.f32 %v1040, %v1414
    %v1416 = vpop.f32.mrf.mxu0
    %1417 = vdwg.mxu0
    %v1418 = vrot.slane %v811, 6
    %v1419 = vrot.slane %v813, 5
    %v1420 = vsel %vm818, %v1419, %v1418
    %v1421 = vsel %vm820, %v1420, 0
    %1423 = vmatprep.subr.mxu0 0.0
    %1424 = vmatpush1.msra.mxu0 0.0
    %1425 = vmatprep.subr.mxu0 0.0
    %1426 = vmatpush1.msra.mxu0 0.0
    %1427 = vmatprep.subr.mxu0 0.0
    %1428 = vmatpush1.msra.mxu0 0.0
    %1429 = vmatprep.subr.mxu0 0.0
    %1430 = vmatpush1.msra.mxu0 0.0
    %1431 = vmatprep.subr.mxu0 0.0
    %1432 = vmatpush1.msra.mxu0 0.0
    %1433 = vmatprep.subr.mxu0 0.0
    %1434 = vmatpush1.msra.mxu0 0.0
    %1435 = vmatprep.subr.mxu0 0.0
    %1436 = vmatpush1.msra.mxu0 0.0
    %1437 = vmatprep.subr.mxu0 0.0
    %1438 = vmatpush1.msra.mxu0 0.0
    %1439 = vmatprep.subr.mxu0 0.0
    %1440 = vmatpush1.msra.mxu0 0.0
    %1441 = vmatprep.subr.mxu0 0.0
    %1442 = vmatpush1.msra.mxu0 0.0
    %1443 = vmatprep.subr.mxu0 0.0
    %1444 = vmatpush1.msra.mxu0 0.0
    %1445 = vmatprep.subr.mxu0 0.0
    %1446 = vmatpush1.msra.mxu0 0.0
    %1447 = vmatprep.subr.mxu0 0.0
    %1448 = vmatpush1.msra.mxu0 0.0
    %1449 = vmatprep.subr.mxu0 0.0
    %1450 = vmatpush1.msra.mxu0 0.0
    %1451 = vmatprep.subr.mxu0 0.0
    %1452 = vmatpush1.msra.mxu0 0.0
    %1453 = vmatprep.subr.mxu0 0.0
    %1454 = vmatpush1.msra.mxu0 %v60
    %1455 = vmatprep.subr.mxu0 0.0
    %1456 = vmatpush2.msra.mxu0 0.0
    %1457 = vmatprep.subr.mxu0 0.0
    %1458 = vmatpush2.msra.mxu0 0.0
    %1459 = vmatprep.subr.mxu0 0.0
    %1460 = vmatpush2.msra.mxu0 0.0
    %1461 = vmatprep.subr.mxu0 0.0
    %1462 = vmatpush2.msra.mxu0 0.0
    %1463 = vmatprep.subr.mxu0 0.0
    %1464 = vmatpush2.msra.mxu0 0.0
    %1465 = vmatprep.subr.mxu0 0.0
    %1466 = vmatpush2.msra.mxu0 0.0
    %1467 = vmatprep.subr.mxu0 0.0
    %1468 = vmatpush2.msra.mxu0 0.0
    %1469 = vmatprep.subr.mxu0 0.0
    %1470 = vmatpush2.msra.mxu0 0.0
    %1471 = vmatprep.subr.mxu0 0.0
    %1472 = vmatpush2.msra.mxu0 0.0
    %1473 = vmatprep.subr.mxu0 0.0
    %1474 = vmatpush2.msra.mxu0 0.0
    %1475 = vmatprep.subr.mxu0 0.0
    %1476 = vmatpush2.msra.mxu0 0.0
    %1477 = vmatprep.subr.mxu0 0.0
    %1478 = vmatpush2.msra.mxu0 0.0
    %1479 = vmatprep.subr.mxu0 0.0
    %1480 = vmatpush2.msra.mxu0 0.0
    %1481 = vmatprep.subr.mxu0 0.0
    %1482 = vmatpush2.msra.mxu0 0.0
    %1483 = vmatprep.subr.mxu0 0.0
    %1484 = vmatpush2.msra.mxu0 0.0
    %1485 = vmatprep.subr.mxu0 0.0
    %1486 = vmatpush2.msra.mxu0 0.0
    %1487 = vmatprep.mubr.f32.mxu0 0.0
    %1488 = vmatmul.mubr.f32.gmra.mxu0 %v1421
    %v1489 = vpop.f32.mrf.mxu0
    %v1490 = vadd.f32 %v1115, %v1489
    %v1491 = vpop.f32.mrf.mxu0
    %1492 = vdwg.mxu0
    %v1493 = vrot.slane %v814, 7
    %v1494 = vsel %vm818, %v1493, %v812
    %v1495 = vsel %vm820, %v1494, 0
    %1497 = vmatprep.subr.mxu0 0.0
    %1498 = vmatpush1.msra.mxu0 0.0
    %1499 = vmatprep.subr.mxu0 0.0
    %1500 = vmatpush1.msra.mxu0 0.0
    %1501 = vmatprep.subr.mxu0 0.0
    %1502 = vmatpush1.msra.mxu0 0.0
    %1503 = vmatprep.subr.mxu0 0.0
    %1504 = vmatpush1.msra.mxu0 0.0
    %1505 = vmatprep.subr.mxu0 0.0
    %1506 = vmatpush1.msra.mxu0 0.0
    %1507 = vmatprep.subr.mxu0 0.0
    %1508 = vmatpush1.msra.mxu0 0.0
    %1509 = vmatprep.subr.mxu0 0.0
    %1510 = vmatpush1.msra.mxu0 0.0
    %1511 = vmatprep.subr.mxu0 0.0
    %1512 = vmatpush1.msra.mxu0 0.0
    %1513 = vmatprep.subr.mxu0 0.0
    %1514 = vmatpush1.msra.mxu0 0.0
    %1515 = vmatprep.subr.mxu0 0.0
    %1516 = vmatpush1.msra.mxu0 0.0
    %1517 = vmatprep.subr.mxu0 0.0
    %1518 = vmatpush1.msra.mxu0 0.0
    %1519 = vmatprep.subr.mxu0 0.0
    %1520 = vmatpush1.msra.mxu0 0.0
    %1521 = vmatprep.subr.mxu0 0.0
    %1522 = vmatpush1.msra.mxu0 0.0
    %1523 = vmatprep.subr.mxu0 0.0
    %1524 = vmatpush1.msra.mxu0 0.0
    %1525 = vmatprep.subr.mxu0 0.0
    %1526 = vmatpush1.msra.mxu0 0.0
    %1527 = vmatprep.subr.mxu0 0.0
    %1528 = vmatpush1.msra.mxu0 %v62
    %1529 = vmatprep.subr.mxu0 0.0
    %1530 = vmatpush2.msra.mxu0 0.0
    %1531 = vmatprep.subr.mxu0 0.0
    %1532 = vmatpush2.msra.mxu0 0.0
    %1533 = vmatprep.subr.mxu0 0.0
    %1534 = vmatpush2.msra.mxu0 0.0
    %1535 = vmatprep.subr.mxu0 0.0
    %1536 = vmatpush2.msra.mxu0 0.0
    %1537 = vmatprep.subr.mxu0 0.0
    %1538 = vmatpush2.msra.mxu0 0.0
    %1539 = vmatprep.subr.mxu0 0.0
    %1540 = vmatpush2.msra.mxu0 0.0
    %1541 = vmatprep.subr.mxu0 0.0
    %1542 = vmatpush2.msra.mxu0 0.0
    %1543 = vmatprep.subr.mxu0 0.0
    %1544 = vmatpush2.msra.mxu0 0.0
    %1545 = vmatprep.subr.mxu0 0.0
    %1546 = vmatpush2.msra.mxu0 0.0
    %1547 = vmatprep.subr.mxu0 0.0
    %1548 = vmatpush2.msra.mxu0 0.0
    %1549 = vmatprep.subr.mxu0 0.0
    %1550 = vmatpush2.msra.mxu0 0.0
    %1551 = vmatprep.subr.mxu0 0.0
    %1552 = vmatpush2.msra.mxu0 0.0
    %1553 = vmatprep.subr.mxu0 0.0
    %1554 = vmatpush2.msra.mxu0 0.0
    %1555 = vmatprep.subr.mxu0 0.0
    %1556 = vmatpush2.msra.mxu0 0.0
    %1557 = vmatprep.subr.mxu0 0.0
    %1558 = vmatpush2.msra.mxu0 0.0
    %1559 = vmatprep.subr.mxu0 0.0
    %1560 = vmatpush2.msra.mxu0 0.0
    %1561 = vmatprep.mubr.f32.mxu0 0.0
    %1562 = vmatmul.mubr.f32.gmra.mxu0 %v1495
    %v1563 = vpop.f32.mrf.mxu0
    %v1564 = vadd.f32 %v1191, %v1563
    %v1565 = vpop.f32.mrf.mxu0
    %1566 = vdwg.mxu0
    %v1567 = vadd.f32 %v1265, %v1340
    %v1568 = vadd.f32 %v1415, %v1490
    %v1569 = vadd.f32 %v1567, %v1568
    %v1570 = vadd.f32 %v1569, %v1564
    %v1572 = vlaneseq
    %v1573 = vshrl.u32 %v1572, 7
    %v1574 = vsub.s32 0, %v1573
    %v1575 = vrot.slane %v64, %v1574
    %v1577 = vadd.f32 %v1570, %v1575
    %v1578 = vmax.f32 %v1577, 0.0
    %v1580 = vlaneseq
    %v1581 = vshrl.u32 %v1580, 7
    %v1582 = vsub.s32 0, %v1581
    %v1583 = vrot.slane %v75, %v1582
    %vm1585 = vcmask 654336
    %v1587 = vsel %vm1585, %v1578, 0
    %1589 = vmatprep.subr.mxu0 0.0
    %1590 = vmatpush1.msra.mxu0 0.0
    %1591 = vmatprep.subr.mxu0 0.0
    %1592 = vmatpush1.msra.mxu0 0.0
    %1593 = vmatprep.subr.mxu0 0.0
    %1594 = vmatpush1.msra.mxu0 0.0
    %1595 = vmatprep.subr.mxu0 0.0
    %1596 = vmatpush1.msra.mxu0 0.0
    %1597 = vmatprep.subr.mxu0 0.0
    %1598 = vmatpush1.msra.mxu0 0.0
    %1599 = vmatprep.subr.mxu0 0.0
    %1600 = vmatpush1.msra.mxu0 0.0
    %1601 = vmatprep.subr.mxu0 0.0
    %1602 = vmatpush1.msra.mxu0 %v74
    %1603 = vmatprep.subr.mxu0 0.0
    %1604 = vmatpush1.msra.mxu0 %v73
    %1605 = vmatprep.subr.mxu0 0.0
    %1606 = vmatpush1.msra.mxu0 %v72
    %1607 = vmatprep.subr.mxu0 0.0
    %1608 = vmatpush1.msra.mxu0 %v71
    %1609 = vmatprep.subr.mxu0 0.0
    %1610 = vmatpush1.msra.mxu0 %v70
    %1611 = vmatprep.subr.mxu0 0.0
    %1612 = vmatpush1.msra.mxu0 %v69
    %1613 = vmatprep.subr.mxu0 0.0
    %1614 = vmatpush1.msra.mxu0 %v68
    %1615 = vmatprep.subr.mxu0 0.0
    %1616 = vmatpush1.msra.mxu0 %v67
    %1617 = vmatprep.subr.mxu0 0.0
    %1618 = vmatpush1.msra.mxu0 %v66
    %1619 = vmatprep.subr.mxu0 0.0
    %1620 = vmatpush1.msra.mxu0 %v65
    %1621 = vmatprep.subr.mxu0 0.0
    %1622 = vmatpush2.msra.mxu0 0.0
    %1623 = vmatprep.subr.mxu0 0.0
    %1624 = vmatpush2.msra.mxu0 0.0
    %1625 = vmatprep.subr.mxu0 0.0
    %1626 = vmatpush2.msra.mxu0 0.0
    %1627 = vmatprep.subr.mxu0 0.0
    %1628 = vmatpush2.msra.mxu0 0.0
    %1629 = vmatprep.subr.mxu0 0.0
    %1630 = vmatpush2.msra.mxu0 0.0
    %1631 = vmatprep.subr.mxu0 0.0
    %1632 = vmatpush2.msra.mxu0 0.0
    %1633 = vmatprep.subr.mxu0 0.0
    %1634 = vmatpush2.msra.mxu0 0.0
    %1635 = vmatprep.subr.mxu0 0.0
    %1636 = vmatpush2.msra.mxu0 0.0
    %1637 = vmatprep.subr.mxu0 0.0
    %1638 = vmatpush2.msra.mxu0 0.0
    %1639 = vmatprep.subr.mxu0 0.0
    %1640 = vmatpush2.msra.mxu0 0.0
    %1641 = vmatprep.subr.mxu0 0.0
    %1642 = vmatpush2.msra.mxu0 0.0
    %1643 = vmatprep.subr.mxu0 0.0
    %1644 = vmatpush2.msra.mxu0 0.0
    %1645 = vmatprep.subr.mxu0 0.0
    %1646 = vmatpush2.msra.mxu0 0.0
    %1647 = vmatprep.subr.mxu0 0.0
    %1648 = vmatpush2.msra.mxu0 0.0
    %1649 = vmatprep.subr.mxu0 0.0
    %1650 = vmatpush2.msra.mxu0 0.0
    %1651 = vmatprep.subr.mxu0 0.0
    %1652 = vmatpush2.msra.mxu0 0.0
    %1653 = vmatprep.mubr.f32.mxu0 0.0
    %1654 = vmatmul.mubr.f32.gmra.mxu0 %v1587
    %v1655 = vpop.f32.mrf.mxu0
    %v1656 = vadd.f32 %v1583, %v1655
    %v1657 = vpop.f32.mrf.mxu0
    %1658 = vdwg.mxu0
    %v1659 = vmax.f32 %v1656, 0.0
    %v1661 = vlaneseq
    %v1662 = vshrl.u32 %v1661, 7
    %v1663 = vsub.s32 0, %v1662
    %v1664 = vrot.slane %v78, %v1663
    %vm1666 = vcmask 130048
    %v1668 = vsel %vm1666, %v1659, 0
    %1670 = vmatprep.subr.mxu0 0.0
    %1671 = vmatpush1.msra.mxu0 0.0
    %1672 = vmatprep.subr.mxu0 0.0
    %1673 = vmatpush1.msra.mxu0 0.0
    %1674 = vmatprep.subr.mxu0 0.0
    %1675 = vmatpush1.msra.mxu0 0.0
    %1676 = vmatprep.subr.mxu0 0.0
    %1677 = vmatpush1.msra.mxu0 0.0
    %1678 = vmatprep.subr.mxu0 0.0
    %1679 = vmatpush1.msra.mxu0 0.0
    %1680 = vmatprep.subr.mxu0 0.0
    %1681 = vmatpush1.msra.mxu0 0.0
    %1682 = vmatprep.subr.mxu0 0.0
    %1683 = vmatpush1.msra.mxu0 0.0
    %1684 = vmatprep.subr.mxu0 0.0
    %1685 = vmatpush1.msra.mxu0 0.0
    %1686 = vmatprep.subr.mxu0 0.0
    %1687 = vmatpush1.msra.mxu0 0.0
    %1688 = vmatprep.subr.mxu0 0.0
    %1689 = vmatpush1.msra.mxu0 0.0
    %1690 = vmatprep.subr.mxu0 0.0
    %1691 = vmatpush1.msra.mxu0 0.0
    %1692 = vmatprep.subr.mxu0 0.0
    %1693 = vmatpush1.msra.mxu0 0.0
    %1694 = vmatprep.subr.mxu0 0.0
    %1695 = vmatpush1.msra.mxu0 0.0
    %1696 = vmatprep.subr.mxu0 0.0
    %1697 = vmatpush1.msra.mxu0 0.0
    %1698 = vmatprep.subr.mxu0 0.0
    %1699 = vmatpush1.msra.mxu0 %v77
    %1700 = vmatprep.subr.mxu0 0.0
    %1701 = vmatpush1.msra.mxu0 %v76
    %1702 = vmatprep.subr.mxu0 0.0
    %1703 = vmatpush2.msra.mxu0 0.0
    %1704 = vmatprep.subr.mxu0 0.0
    %1705 = vmatpush2.msra.mxu0 0.0
    %1706 = vmatprep.subr.mxu0 0.0
    %1707 = vmatpush2.msra.mxu0 0.0
    %1708 = vmatprep.subr.mxu0 0.0
    %1709 = vmatpush2.msra.mxu0 0.0
    %1710 = vmatprep.subr.mxu0 0.0
    %1711 = vmatpush2.msra.mxu0 0.0
    %1712 = vmatprep.subr.mxu0 0.0
    %1713 = vmatpush2.msra.mxu0 0.0
    %1714 = vmatprep.subr.mxu0 0.0
    %1715 = vmatpush2.msra.mxu0 0.0
    %1716 = vmatprep.subr.mxu0 0.0
    %1717 = vmatpush2.msra.mxu0 0.0
    %1718 = vmatprep.subr.mxu0 0.0
    %1719 = vmatpush2.msra.mxu0 0.0
    %1720 = vmatprep.subr.mxu0 0.0
    %1721 = vmatpush2.msra.mxu0 0.0
    %1722 = vmatprep.subr.mxu0 0.0
    %1723 = vmatpush2.msra.mxu0 0.0
    %1724 = vmatprep.subr.mxu0 0.0
    %1725 = vmatpush2.msra.mxu0 0.0
    %1726 = vmatprep.subr.mxu0 0.0
    %1727 = vmatpush2.msra.mxu0 0.0
    %1728 = vmatprep.subr.mxu0 0.0
    %1729 = vmatpush2.msra.mxu0 0.0
    %1730 = vmatprep.subr.mxu0 0.0
    %1731 = vmatpush2.msra.mxu0 0.0
    %1732 = vmatprep.subr.mxu0 0.0
    %1733 = vmatpush2.msra.mxu0 0.0
    %1734 = vmatprep.mubr.f32.mxu0 0.0
    %1735 = vmatmul.mubr.f32.gmra.mxu0 %v1668
    %v1736 = vpop.f32.mrf.mxu0
    %v1737 = vadd.f32 %v1664, %v1736
    %v1738 = vpop.f32.mrf.mxu0
    %1739 = vdwg.mxu0
    %1740 = vst [vmem:[#allocation2] sm:$0x3] %v1737
    // Predicated region
    $region42: #{gcn_forward.1} parent=1 // pred_check
      _
    $region43: #{gcn_forward.1} parent=1 // pred_check_branch
      %1742 = sbr.rel (0) target = $region45
    $region44: #{gcn_forward.1} parent=1 // pred_region
      %s1744 = ssub.s32 32, 32
      %1745 = vsyncadd [#allocation3], %s1744
      %s1747 = sshll.u32 [#allocation2], 4
      %s1748 = int_to_ptr.vmem [resolvable:$true] %s1747
      %1750 = dma.vmem_to_hbm [thread:$0]  %s1748, 32, %s10, [#allocation3]
    $region45: #{gcn_forward.1} parent=1 // pred_fallthru
      _
    // Predicated region
    $region46: #{gcn_forward.1} parent=1 // pred_check
      _
    $region47: #{gcn_forward.1} parent=1 // pred_check_branch
      %1752 = sbr.rel (0) target = $region49
    $region48: #{gcn_forward.1} parent=1 // pred_region
      %1753 = dma.done [#allocation3], 32
    $region49: #{gcn_forward.1} parent=1 // pred_fallthru
      _
    %1754 = vsyncpa [#allocation3], 1

</llo_original>
